<compile_context>
chip_gen: v6e
topology: v6e:2x2x1
jax: 0.10.0
libtpu: 0.0.40
codegen_flags: <defaults>
</compile_context>

<pallas_src>
import jax
import jax.numpy as jnp
from jax.experimental import pallas as pl
from jax.experimental.pallas import tpu as pltpu


# --- model dimensions (from the PyTorch module) ------------------------------
D_L = 72
TEXT_DIM = 768
VISUAL_DIM = 47
ACOUSTIC_DIM = 74

D_PAD = 128                                           # lane-dense padded d_l
K_RAW = 2 * (ACOUSTIC_DIM + VISUAL_DIM + TEXT_DIM)    # 1778
K_PAD = 1792                                          # next multiple of 128

# lane offsets of the packed (bias; gamma; beta) buffer, one 128-aligned
# segment per classifier layer (widths 72->pad128, 128, 256, 128, + final bias)
OFF1, OFF2, OFF3, OFF4, OFF5 = 0, 128, 256, 512, 640
P_COLS = 768


# -----------------------------------------------------------------------------
# Fused Pallas kernel: folded last-step projections + classifier MLP.
#   x  (B, K_PAD)   bf16   concat(xa2, xv2, xl2), zero-padded
#   wf (K_PAD, 128) bf16   folded [Wa2@W1_a; Wv2@W1_v; Wl2@W1_l], zero-padded
#   w2 (128, 128) f32, w3 (128, 256) f32, w4 (256, 128) f32, w5 (128, 1) f32
#   p  (3, 768)   f32   rows = bias / LN gamma / LN beta, 128-aligned segments
# Output: (B, 1) f32
# -----------------------------------------------------------------------------
def _euar_fused_kernel(x_ref, wf_ref, w2_ref, w3_ref, w4_ref, w5_ref, p_ref,
                       o_ref):
    f32 = jnp.float32

    def ln_relu(h, off, n_valid, eps):
        # PyTorch LayerNorm over the first `n_valid` lanes; any padded lanes
        # of h are exactly zero (zero weights/bias), so plain sums are exact.
        # Single-pass moments form keeps the two reductions independent.
        w = h.shape[-1]
        inv_n = 1.0 / n_valid
        m = jnp.sum(h, axis=-1, keepdims=True) * inv_n
        msq = jnp.sum(h * h, axis=-1, keepdims=True) * inv_n
        var = jnp.maximum(msq - m * m, 0.0)
        gamma = p_ref[1:2, off:off + w]        # padded lanes carry gamma=0
        beta = p_ref[2:3, off:off + w]
        ln = (h - m) * jax.lax.rsqrt(var + eps) * gamma + beta
        return jnp.maximum(ln, 0.0)

    # Layer 1: conv last-steps + concat + Linear(216->72) folded into ONE matmul.
    h = jnp.dot(x_ref[...], wf_ref[...], preferred_element_type=f32)
    h = ln_relu(h + p_ref[0:1, OFF1:OFF1 + D_PAD], OFF1, float(D_L), 2e-5)

    h = jnp.dot(h, w2_ref[...], preferred_element_type=f32)
    h = ln_relu(h + p_ref[0:1, OFF2:OFF2 + 128], OFF2, 128.0, 2e-5)

    h = jnp.dot(h, w3_ref[...], preferred_element_type=f32)
    h = ln_relu(h + p_ref[0:1, OFF3:OFF3 + 256], OFF3, 256.0, 1e-5)

    h = jnp.dot(h, w4_ref[...], preferred_element_type=f32)
    h = ln_relu(h + p_ref[0:1, OFF4:OFF4 + 128], OFF4, 128.0, 2e-5)

    out = (jnp.dot(h, w5_ref[...], preferred_element_type=f32)
           + p_ref[0:1, OFF5:OFF5 + 1])
    o_ref[...] = out.astype(o_ref.dtype)


def euar_fused(x_cat, fused):
    """Single gridless pallas_call; everything VMEM-resident."""
    B = x_cat.shape[0]
    args = [x_cat, fused["w_fold"], fused["w2"], fused["w3"], fused["w4"],
            fused["w5"], fused["p"]]
    bytes_accessed = sum(int(a.size) * a.dtype.itemsize for a in args) + B * 4
    flops = 2 * B * (K_PAD * D_PAD + 128 * 128 + 128 * 256 + 256 * 128 + 128)
    vmem = pltpu.MemorySpace.VMEM
    return pl.pallas_call(
        _euar_fused_kernel,
        out_shape=jax.ShapeDtypeStruct((B, 1), jnp.float32),
        in_specs=[pl.BlockSpec(memory_space=vmem) for _ in args],
        out_specs=pl.BlockSpec(memory_space=vmem),
        cost_estimate=pl.CostEstimate(flops=flops, transcendentals=4 * B,
                                      bytes_accessed=bytes_accessed),
    )(*args)


# -----------------------------------------------------------------------------
# Parameter construction (deterministic, in-script; PyTorch-equivalent layout).
# Conv1d weights stored as (K=3, Cin, Cout); w[0] is the tap applied to x[t-1].
# -----------------------------------------------------------------------------
def make_params(key):
    ks = iter(jax.random.split(key, 16))

    def conv_w(k, cin, cout):
        return jax.random.normal(k, (3, cin, cout), jnp.float32) * jnp.sqrt(
            1.0 / (3.0 * cin))

    raw = {
        "proj_a": conv_w(next(ks), ACOUSTIC_DIM, D_L),
        "proj_v": conv_w(next(ks), VISUAL_DIM, D_L),
        "proj_l": conv_w(next(ks), TEXT_DIM, D_L),
    }
    # Classifier: Linear->LN->ReLU x4 -> Linear(128,1); kaiming fan_in/relu init.
    dims = [(3 * D_L, D_L), (D_L, 128), (128, 256), (256, 128), (128, 1)]
    clf = []
    for din, dout in dims:
        w = jax.random.normal(next(ks), (din, dout), jnp.float32) * jnp.sqrt(
            2.0 / din)
        clf.append({"w": w,
                    "b": jnp.zeros((dout,), jnp.float32),
                    "gamma": jnp.ones((dout,), jnp.float32),
                    "beta": jnp.zeros((dout,), jnp.float32)})
    raw["classifier"] = clf
    return raw


def prepare_fused(raw):
    """One-time fold / pack / pad / cast of parameters for the fused kernel."""
    clf = raw["classifier"]
    w1 = clf[0]["w"]                                          # (216, 72)

    def taps(w_kio):  # [w0; w1] of the two live conv taps at the last step
        return w_kio[:2].reshape(2 * w_kio.shape[1], w_kio.shape[2])

    # feature = cat(audio, visual, text) @ W1  ->  fold conv taps into W1 blocks
    wa_f = taps(raw["proj_a"]) @ w1[0:D_L]                    # (148, 72)
    wv_f = taps(raw["proj_v"]) @ w1[D_L:2 * D_L]              # (94, 72)
    wl_f = taps(raw["proj_l"]) @ w1[2 * D_L:3 * D_L]          # (1536, 72)
    w_fold = jnp.concatenate([wa_f, wv_f, wl_f], axis=0)      # (1778, 72)
    w_fold = jnp.pad(w_fold, ((0, K_PAD - K_RAW), (0, D_PAD - D_L)))
    w_fold = w_fold.astype(jnp.bfloat16)                      # (1792, 128) bf16

    w2 = jnp.pad(clf[1]["w"], ((0, D_PAD - D_L), (0, 0)))     # (128, 128)
    w3 = clf[2]["w"]                                          # (128, 256)
    w4 = clf[3]["w"]                                          # (256, 128)
    w5 = clf[4]["w"]                                          # (128, 1)

    # packed (bias; gamma; beta), 128-lane-aligned segments; padding stays 0.
    p = jnp.zeros((3, P_COLS), jnp.float32)

    def put(buf, off, layer):
        width = layer["b"].shape[0]
        buf = buf.at[0, off:off + width].set(layer["b"])
        buf = buf.at[1, off:off + width].set(layer["gamma"])
        buf = buf.at[2, off:off + width].set(layer["beta"])
        return buf

    p = put(p, OFF1, clf[0])
    p = put(p, OFF2, clf[1])
    p = put(p, OFF3, clf[2])
    p = put(p, OFF4, clf[3])
    p = p.at[0, OFF5].set(clf[4]["b"][0])                     # final bias
    return {"w_fold": w_fold, "w2": w2, "w3": w3, "w4": w4, "w5": w5, "p": p}


# -----------------------------------------------------------------------------
# EUAR.test() forward path.
# -----------------------------------------------------------------------------
@jax.jit
def euar_test(text_hidden, visual, acoustic, fused):
    """text_hidden: (B, Lt, 768); visual: (B, Lv, 47); acoustic: (B, La, 74)."""
    B = text_hidden.shape[0]
    # Conv1d(k=3,s=1,p=1) at t = L-1:  [x[L-2] | x[L-1]] (the zero pad tap drops)
    xa2 = acoustic[:, -2:, :].reshape(B, 2 * ACOUSTIC_DIM)
    xv2 = visual[:, -2:, :].reshape(B, 2 * VISUAL_DIM)
    xl2 = text_hidden[:, -2:, :].reshape(B, 2 * TEXT_DIM)
    x_cat = jnp.concatenate([xa2, xv2, xl2], axis=1)          # (B, 1778)
    x_cat = jnp.pad(x_cat, ((0, 0), (0, K_PAD - K_RAW))).astype(jnp.bfloat16)
    # TODO(synk): for repeated serving, batch requests to B >= 8 (free in cycles)
    #             or cross-call-prefetch the folded weight.
    return euar_fused(x_cat, fused)


# Pure-JAX f32 reference (same TODO assumptions) for a correctness self-check.
def euar_reference(text_hidden, visual, acoustic, raw):
    def conv_last(x, w_kio):
        return x[:, -2] @ w_kio[0] + x[:, -1] @ w_kio[1]

    out_a = conv_last(acoustic, raw["proj_a"])
    out_v = conv_last(visual, raw["proj_v"])
    out_l = conv_last(text_hidden, raw["proj_l"])
    h = jnp.concatenate([out_a, out_v, out_l], axis=1)
    clf = raw["classifier"]
    for i, eps in enumerate([2e-5, 2e-5, 1e-5, 2e-5]):
        h = h @ clf[i]["w"] + clf[i]["b"]
        m = jnp.mean(h, -1, keepdims=True)
        v = jnp.mean((h - m) ** 2, -1, keepdims=True)
        h = (h - m) * jax.lax.rsqrt(v + eps) * clf[i]["gamma"] + clf[i]["beta"]
        h = jnp.maximum(h, 0.0)
    return h @ clf[4]["w"] + clf[4]["b"]


if __name__ == "__main__":
    B = 2
    LT, LA, LV = 16, 16, 16

    key = jax.random.PRNGKey(0)
    k_text, k_vis, k_ac, k_par = jax.random.split(key, 4)

    text_hidden = jax.random.normal(k_text, (B, LT, TEXT_DIM), dtype=jnp.float32)
    visual = jax.random.normal(k_vis, (B, LV, VISUAL_DIM), dtype=jnp.float32)
    acoustic = jax.random.normal(k_ac, (B, LA, ACOUSTIC_DIM), dtype=jnp.float32)

    raw_params = make_params(k_par)
    fused_params = prepare_fused(raw_params)

    out = euar_test(text_hidden, visual, acoustic, fused_params)
    out = jax.block_until_ready(out)

    assert out.shape == (B, 1) and out.dtype == jnp.float32
    assert bool(jnp.isfinite(out).all())

    # Loose self-check vs. a pure-JAX f32 reference (bf16 only on the K=1778
    # contraction, so differences stay small relative to the O(1) output).
    ref = euar_reference(text_hidden, visual, acoustic, raw_params)
    max_err = float(jnp.max(jnp.abs(out - ref)))
    assert max_err < 2.5e-1, f"mismatch vs reference: {max_err}"

    print("KERNEL_OK")
</pallas_src>

<mosaic_0001>
module attributes {stable_mosaic.version = 11 : i64} {
  func.func @_euar_fused_kernel(%arg0: memref<2x1792xbf16, #tpu.memory_space<vmem>>, %arg1: memref<1792x128xbf16, #tpu.memory_space<vmem>>, %arg2: memref<128x128xf32, #tpu.memory_space<vmem>>, %arg3: memref<128x256xf32, #tpu.memory_space<vmem>>, %arg4: memref<256x128xf32, #tpu.memory_space<vmem>>, %arg5: memref<128x1xf32, #tpu.memory_space<vmem>>, %arg6: memref<3x768xf32, #tpu.memory_space<vmem>>, %arg7: memref<2x1xf32, #tpu.memory_space<vmem>>) attributes {dimension_semantics = [], scalar_prefetch = 0 : i64, scratch_operands = 0 : i64, tpu.core_type = #tpu.core_type<tc>} {
    %c0 = arith.constant 0 : index
    %c0_0 = arith.constant 0 : index
    %0 = vector.load %arg0[%c0, %c0_0] : memref<2x1792xbf16, #tpu.memory_space<vmem>>, vector<2x1792xbf16>
    %c0_1 = arith.constant 0 : index
    %c0_2 = arith.constant 0 : index
    %1 = vector.load %arg1[%c0_1, %c0_2] : memref<1792x128xbf16, #tpu.memory_space<vmem>>, vector<1792x128xbf16>
    %cst = arith.constant dense<0.000000e+00> : vector<2x128xf32>
    %2 = tpu.matmul %0, %1, %cst {dimension_numbers = #tpu.dot_dimension_numbers<[1], [0], [0], [1], [0, 0, 1, 1], [], []>} : vector<2x1792xbf16>, vector<1792x128xbf16>, vector<2x128xf32> -> vector<2x128xf32>
    %c0_3 = arith.constant 0 : index
    %c0_4 = arith.constant 0 : index
    %3 = vector.load %arg6[%c0_3, %c0_4] : memref<3x768xf32, #tpu.memory_space<vmem>>, vector<1x128xf32>
    %4 = vector.broadcast %3 : vector<1x128xf32> to vector<2x128xf32>
    %5 = arith.addf %2, %4 : vector<2x128xf32>
    %cst_5 = arith.constant dense<0.000000e+00> : vector<2xf32>
    %6 = vector.multi_reduction <add>, %5, %cst_5 [1] : vector<2x128xf32> to vector<2xf32>
    %7 = vector.shape_cast %6 : vector<2xf32> to vector<2x1xf32>
    %cst_6 = arith.constant 0.013888889 : f32
    %8 = vector.broadcast %cst_6 : f32 to vector<2x1xf32>
    %9 = arith.mulf %7, %8 : vector<2x1xf32>
    %10 = arith.mulf %5, %5 : vector<2x128xf32>
    %cst_7 = arith.constant dense<0.000000e+00> : vector<2xf32>
    %11 = vector.multi_reduction <add>, %10, %cst_7 [1] : vector<2x128xf32> to vector<2xf32>
    %12 = vector.shape_cast %11 : vector<2xf32> to vector<2x1xf32>
    %cst_8 = arith.constant 0.013888889 : f32
    %13 = vector.broadcast %cst_8 : f32 to vector<2x1xf32>
    %14 = arith.mulf %12, %13 : vector<2x1xf32>
    %15 = arith.mulf %9, %9 : vector<2x1xf32>
    %16 = arith.subf %14, %15 : vector<2x1xf32>
    %cst_9 = arith.constant 0.000000e+00 : f32
    %17 = vector.broadcast %cst_9 : f32 to vector<2x1xf32>
    %18 = arith.maximumf %16, %17 : vector<2x1xf32>
    %c1 = arith.constant 1 : index
    %c0_10 = arith.constant 0 : index
    %19 = vector.load %arg6[%c1, %c0_10] : memref<3x768xf32, #tpu.memory_space<vmem>>, vector<1x128xf32>
    %c2 = arith.constant 2 : index
    %c0_11 = arith.constant 0 : index
    %20 = vector.load %arg6[%c2, %c0_11] : memref<3x768xf32, #tpu.memory_space<vmem>>, vector<1x128xf32>
    %21 = vector.broadcast %9 : vector<2x1xf32> to vector<2x128xf32>
    %22 = arith.subf %5, %21 : vector<2x128xf32>
    %cst_12 = arith.constant 2.000000e-05 : f32
    %23 = vector.broadcast %cst_12 : f32 to vector<2x1xf32>
    %24 = arith.addf %18, %23 : vector<2x1xf32>
    %25 = math.rsqrt %24 : vector<2x1xf32>
    %26 = vector.broadcast %25 : vector<2x1xf32> to vector<2x128xf32>
    %27 = arith.mulf %22, %26 : vector<2x128xf32>
    %28 = vector.broadcast %19 : vector<1x128xf32> to vector<2x128xf32>
    %29 = arith.mulf %27, %28 : vector<2x128xf32>
    %30 = vector.broadcast %20 : vector<1x128xf32> to vector<2x128xf32>
    %31 = arith.addf %29, %30 : vector<2x128xf32>
    %cst_13 = arith.constant 0.000000e+00 : f32
    %32 = vector.broadcast %cst_13 : f32 to vector<2x128xf32>
    %33 = arith.maximumf %31, %32 : vector<2x128xf32>
    %c0_14 = arith.constant 0 : index
    %c0_15 = arith.constant 0 : index
    %34 = vector.load %arg2[%c0_14, %c0_15] : memref<128x128xf32, #tpu.memory_space<vmem>>, vector<128x128xf32>
    %cst_16 = arith.constant dense<0.000000e+00> : vector<2x128xf32>
    %35 = tpu.matmul %33, %34, %cst_16 {dimension_numbers = #tpu.dot_dimension_numbers<[1], [0], [0], [1], [0, 0, 1, 1], [], []>} : vector<2x128xf32>, vector<128x128xf32>, vector<2x128xf32> -> vector<2x128xf32>
    %c0_17 = arith.constant 0 : index
    %c128 = arith.constant 128 : index
    %36 = vector.load %arg6[%c0_17, %c128] : memref<3x768xf32, #tpu.memory_space<vmem>>, vector<1x128xf32>
    %37 = vector.broadcast %36 : vector<1x128xf32> to vector<2x128xf32>
    %38 = arith.addf %35, %37 : vector<2x128xf32>
    %cst_18 = arith.constant dense<0.000000e+00> : vector<2xf32>
    %39 = vector.multi_reduction <add>, %38, %cst_18 [1] : vector<2x128xf32> to vector<2xf32>
    %40 = vector.shape_cast %39 : vector<2xf32> to vector<2x1xf32>
    %cst_19 = arith.constant 7.812500e-03 : f32
    %41 = vector.broadcast %cst_19 : f32 to vector<2x1xf32>
    %42 = arith.mulf %40, %41 : vector<2x1xf32>
    %43 = arith.mulf %38, %38 : vector<2x128xf32>
    %cst_20 = arith.constant dense<0.000000e+00> : vector<2xf32>
    %44 = vector.multi_reduction <add>, %43, %cst_20 [1] : vector<2x128xf32> to vector<2xf32>
    %45 = vector.shape_cast %44 : vector<2xf32> to vector<2x1xf32>
    %cst_21 = arith.constant 7.812500e-03 : f32
    %46 = vector.broadcast %cst_21 : f32 to vector<2x1xf32>
    %47 = arith.mulf %45, %46 : vector<2x1xf32>
    %48 = arith.mulf %42, %42 : vector<2x1xf32>
    %49 = arith.subf %47, %48 : vector<2x1xf32>
    %cst_22 = arith.constant 0.000000e+00 : f32
    %50 = vector.broadcast %cst_22 : f32 to vector<2x1xf32>
    %51 = arith.maximumf %49, %50 : vector<2x1xf32>
    %c1_23 = arith.constant 1 : index
    %c128_24 = arith.constant 128 : index
    %52 = vector.load %arg6[%c1_23, %c128_24] : memref<3x768xf32, #tpu.memory_space<vmem>>, vector<1x128xf32>
    %c2_25 = arith.constant 2 : index
    %c128_26 = arith.constant 128 : index
    %53 = vector.load %arg6[%c2_25, %c128_26] : memref<3x768xf32, #tpu.memory_space<vmem>>, vector<1x128xf32>
    %54 = vector.broadcast %42 : vector<2x1xf32> to vector<2x128xf32>
    %55 = arith.subf %38, %54 : vector<2x128xf32>
    %cst_27 = arith.constant 2.000000e-05 : f32
    %56 = vector.broadcast %cst_27 : f32 to vector<2x1xf32>
    %57 = arith.addf %51, %56 : vector<2x1xf32>
    %58 = math.rsqrt %57 : vector<2x1xf32>
    %59 = vector.broadcast %58 : vector<2x1xf32> to vector<2x128xf32>
    %60 = arith.mulf %55, %59 : vector<2x128xf32>
    %61 = vector.broadcast %52 : vector<1x128xf32> to vector<2x128xf32>
    %62 = arith.mulf %60, %61 : vector<2x128xf32>
    %63 = vector.broadcast %53 : vector<1x128xf32> to vector<2x128xf32>
    %64 = arith.addf %62, %63 : vector<2x128xf32>
    %cst_28 = arith.constant 0.000000e+00 : f32
    %65 = vector.broadcast %cst_28 : f32 to vector<2x128xf32>
    %66 = arith.maximumf %64, %65 : vector<2x128xf32>
    %c0_29 = arith.constant 0 : index
    %c0_30 = arith.constant 0 : index
    %67 = vector.load %arg3[%c0_29, %c0_30] : memref<128x256xf32, #tpu.memory_space<vmem>>, vector<128x256xf32>
    %cst_31 = arith.constant dense<0.000000e+00> : vector<2x256xf32>
    %68 = tpu.matmul %66, %67, %cst_31 {dimension_numbers = #tpu.dot_dimension_numbers<[1], [0], [0], [1], [0, 0, 1, 1], [], []>} : vector<2x128xf32>, vector<128x256xf32>, vector<2x256xf32> -> vector<2x256xf32>
    %c0_32 = arith.constant 0 : index
    %c256 = arith.constant 256 : index
    %69 = vector.load %arg6[%c0_32, %c256] : memref<3x768xf32, #tpu.memory_space<vmem>>, vector<1x256xf32>
    %70 = vector.broadcast %69 : vector<1x256xf32> to vector<2x256xf32>
    %71 = arith.addf %68, %70 : vector<2x256xf32>
    %cst_33 = arith.constant dense<0.000000e+00> : vector<2xf32>
    %72 = vector.multi_reduction <add>, %71, %cst_33 [1] : vector<2x256xf32> to vector<2xf32>
    %73 = vector.shape_cast %72 : vector<2xf32> to vector<2x1xf32>
    %cst_34 = arith.constant 3.906250e-03 : f32
    %74 = vector.broadcast %cst_34 : f32 to vector<2x1xf32>
    %75 = arith.mulf %73, %74 : vector<2x1xf32>
    %76 = arith.mulf %71, %71 : vector<2x256xf32>
    %cst_35 = arith.constant dense<0.000000e+00> : vector<2xf32>
    %77 = vector.multi_reduction <add>, %76, %cst_35 [1] : vector<2x256xf32> to vector<2xf32>
    %78 = vector.shape_cast %77 : vector<2xf32> to vector<2x1xf32>
    %cst_36 = arith.constant 3.906250e-03 : f32
    %79 = vector.broadcast %cst_36 : f32 to vector<2x1xf32>
    %80 = arith.mulf %78, %79 : vector<2x1xf32>
    %81 = arith.mulf %75, %75 : vector<2x1xf32>
    %82 = arith.subf %80, %81 : vector<2x1xf32>
    %cst_37 = arith.constant 0.000000e+00 : f32
    %83 = vector.broadcast %cst_37 : f32 to vector<2x1xf32>
    %84 = arith.maximumf %82, %83 : vector<2x1xf32>
    %c1_38 = arith.constant 1 : index
    %c256_39 = arith.constant 256 : index
    %85 = vector.load %arg6[%c1_38, %c256_39] : memref<3x768xf32, #tpu.memory_space<vmem>>, vector<1x256xf32>
    %c2_40 = arith.constant 2 : index
    %c256_41 = arith.constant 256 : index
    %86 = vector.load %arg6[%c2_40, %c256_41] : memref<3x768xf32, #tpu.memory_space<vmem>>, vector<1x256xf32>
    %87 = vector.broadcast %75 : vector<2x1xf32> to vector<2x256xf32>
    %88 = arith.subf %71, %87 : vector<2x256xf32>
    %cst_42 = arith.constant 9.99999974E-6 : f32
    %89 = vector.broadcast %cst_42 : f32 to vector<2x1xf32>
    %90 = arith.addf %84, %89 : vector<2x1xf32>
    %91 = math.rsqrt %90 : vector<2x1xf32>
    %92 = vector.broadcast %91 : vector<2x1xf32> to vector<2x256xf32>
    %93 = arith.mulf %88, %92 : vector<2x256xf32>
    %94 = vector.broadcast %85 : vector<1x256xf32> to vector<2x256xf32>
    %95 = arith.mulf %93, %94 : vector<2x256xf32>
    %96 = vector.broadcast %86 : vector<1x256xf32> to vector<2x256xf32>
    %97 = arith.addf %95, %96 : vector<2x256xf32>
    %cst_43 = arith.constant 0.000000e+00 : f32
    %98 = vector.broadcast %cst_43 : f32 to vector<2x256xf32>
    %99 = arith.maximumf %97, %98 : vector<2x256xf32>
    %c0_44 = arith.constant 0 : index
    %c0_45 = arith.constant 0 : index
    %100 = vector.load %arg4[%c0_44, %c0_45] : memref<256x128xf32, #tpu.memory_space<vmem>>, vector<256x128xf32>
    %cst_46 = arith.constant dense<0.000000e+00> : vector<2x128xf32>
    %101 = tpu.matmul %99, %100, %cst_46 {dimension_numbers = #tpu.dot_dimension_numbers<[1], [0], [0], [1], [0, 0, 1, 1], [], []>} : vector<2x256xf32>, vector<256x128xf32>, vector<2x128xf32> -> vector<2x128xf32>
    %c0_47 = arith.constant 0 : index
    %c512 = arith.constant 512 : index
    %102 = vector.load %arg6[%c0_47, %c512] : memref<3x768xf32, #tpu.memory_space<vmem>>, vector<1x128xf32>
    %103 = vector.broadcast %102 : vector<1x128xf32> to vector<2x128xf32>
    %104 = arith.addf %101, %103 : vector<2x128xf32>
    %cst_48 = arith.constant dense<0.000000e+00> : vector<2xf32>
    %105 = vector.multi_reduction <add>, %104, %cst_48 [1] : vector<2x128xf32> to vector<2xf32>
    %106 = vector.shape_cast %105 : vector<2xf32> to vector<2x1xf32>
    %cst_49 = arith.constant 7.812500e-03 : f32
    %107 = vector.broadcast %cst_49 : f32 to vector<2x1xf32>
    %108 = arith.mulf %106, %107 : vector<2x1xf32>
    %109 = arith.mulf %104, %104 : vector<2x128xf32>
    %cst_50 = arith.constant dense<0.000000e+00> : vector<2xf32>
    %110 = vector.multi_reduction <add>, %109, %cst_50 [1] : vector<2x128xf32> to vector<2xf32>
    %111 = vector.shape_cast %110 : vector<2xf32> to vector<2x1xf32>
    %cst_51 = arith.constant 7.812500e-03 : f32
    %112 = vector.broadcast %cst_51 : f32 to vector<2x1xf32>
    %113 = arith.mulf %111, %112 : vector<2x1xf32>
    %114 = arith.mulf %108, %108 : vector<2x1xf32>
    %115 = arith.subf %113, %114 : vector<2x1xf32>
    %cst_52 = arith.constant 0.000000e+00 : f32
    %116 = vector.broadcast %cst_52 : f32 to vector<2x1xf32>
    %117 = arith.maximumf %115, %116 : vector<2x1xf32>
    %c1_53 = arith.constant 1 : index
    %c512_54 = arith.constant 512 : index
    %118 = vector.load %arg6[%c1_53, %c512_54] : memref<3x768xf32, #tpu.memory_space<vmem>>, vector<1x128xf32>
    %c2_55 = arith.constant 2 : index
    %c512_56 = arith.constant 512 : index
    %119 = vector.load %arg6[%c2_55, %c512_56] : memref<3x768xf32, #tpu.memory_space<vmem>>, vector<1x128xf32>
    %120 = vector.broadcast %108 : vector<2x1xf32> to vector<2x128xf32>
    %121 = arith.subf %104, %120 : vector<2x128xf32>
    %cst_57 = arith.constant 2.000000e-05 : f32
    %122 = vector.broadcast %cst_57 : f32 to vector<2x1xf32>
    %123 = arith.addf %117, %122 : vector<2x1xf32>
    %124 = math.rsqrt %123 : vector<2x1xf32>
    %125 = vector.broadcast %124 : vector<2x1xf32> to vector<2x128xf32>
    %126 = arith.mulf %121, %125 : vector<2x128xf32>
    %127 = vector.broadcast %118 : vector<1x128xf32> to vector<2x128xf32>
    %128 = arith.mulf %126, %127 : vector<2x128xf32>
    %129 = vector.broadcast %119 : vector<1x128xf32> to vector<2x128xf32>
    %130 = arith.addf %128, %129 : vector<2x128xf32>
    %cst_58 = arith.constant 0.000000e+00 : f32
    %131 = vector.broadcast %cst_58 : f32 to vector<2x128xf32>
    %132 = arith.maximumf %130, %131 : vector<2x128xf32>
    %c0_59 = arith.constant 0 : index
    %c0_60 = arith.constant 0 : index
    %133 = vector.load %arg5[%c0_59, %c0_60] : memref<128x1xf32, #tpu.memory_space<vmem>>, vector<128x1xf32>
    %cst_61 = arith.constant dense<0.000000e+00> : vector<2x1xf32>
    %134 = tpu.matmul %132, %133, %cst_61 {dimension_numbers = #tpu.dot_dimension_numbers<[1], [0], [0], [1], [0, 0, 1, 1], [], []>} : vector<2x128xf32>, vector<128x1xf32>, vector<2x1xf32> -> vector<2x1xf32>
    %c0_62 = arith.constant 0 : index
    %c640 = arith.constant 640 : index
    %135 = vector.load %arg6[%c0_62, %c640] : memref<3x768xf32, #tpu.memory_space<vmem>>, vector<1x1xf32>
    %136 = vector.broadcast %135 : vector<1x1xf32> to vector<2x1xf32>
    %137 = arith.addf %134, %136 : vector<2x1xf32>
    %c0_63 = arith.constant 0 : index
    %c0_64 = arith.constant 0 : index
    %138 = vector.load %arg7[%c0_63, %c0_64] : memref<2x1xf32, #tpu.memory_space<vmem>>, vector<2x1xf32>
    tpu.vector_store %arg7[%c0_63, %c0_64], %137 {strides = array<i32>} : memref<2x1xf32, #tpu.memory_space<vmem>>, vector<2x1xf32>,
    return
  }
}

</mosaic_0001>

<llo_original>
// kernel: euar_test.1
$region0: #{euar_test.1}
  #allocation0 [shape = 'u32[]', space=smem, size = 0x4, offset = 0x4, fixed_abs, tag = 'smem constant byte address 0x4 - core index']
  #allocation1 [shape = 'u32[144,128]{1,0:T(1,128)}', space=vmem, size = 0x12000, scoped, tag = 'internal scratch']
  %s0 = inlined_call_operand.vmem [shape: bf16[2,1792], index: 0, kind: input, shape index: {}]
  %s1 = inlined_call_operand.hbm [shape: bf16[1792,128], index: 1, kind: input, shape index: {}]
  %s2 = inlined_call_operand.hbm [shape: f32[128,128], index: 2, kind: input, shape index: {}]
  %s3 = inlined_call_operand.vmem [shape: f32[128,256], index: 3, kind: input, shape index: {}]
  %s4 = inlined_call_operand.hbm [shape: f32[256,128], index: 4, kind: input, shape index: {}]
  %s5 = inlined_call_operand.vmem [shape: f32[128,1], index: 5, kind: input, shape index: {}]
  %s6 = inlined_call_operand.hbm [shape: f32[3,768], index: 6, kind: input, shape index: {}]
  %s7 = inlined_call_operand.vmem [shape: f32[2,1], index: 7, kind: output, shape index: {}]
  %s8 = sld [smem:[#allocation0]]
  $region54: #{euar_test.1} parent=0
    _
  %s10 = ssub.s32 1, %s8
  %s11 = scalar_select 0, %s10, %s8
  $region1: #{euar_test.1} parent=0
    #allocation2 [shape = 'u8[458752]{0}', space=vmem, size = 0x70000, scoped, tag = 'input window, operand 1, single buffered']
    #allocation3 [shape = 's32[1]{0}', space=sflag, size = 0x4, scoped, tag = 'scoped memory for euar_test.1']
    #allocation4 [shape = 'u8[65536]{0}', space=vmem, size = 0x10000, scoped, tag = 'input window, operand 2, single buffered']
    #allocation5 [shape = 's32[1]{0}', space=sflag, size = 0x4, scoped, tag = 'scoped memory for euar_test.1']
    #allocation6 [shape = 'u8[131072]{0}', space=vmem, size = 0x20000, scoped, tag = 'input window, operand 4, single buffered']
    #allocation7 [shape = 'u8[12288]{0}', space=vmem, size = 0x3000, scoped, tag = 'input window, operand 6, single buffered']
    #allocation8 [shape = 's32[1]{0}', space=sflag, size = 0x4, scoped, tag = 'scoped memory for euar_test.1']
    %12 = vsyncpa [#allocation3], 0
    %13 = vsyncpa [#allocation5], 0
    %14 = vsyncpa [#allocation8], 0
    // Predicated region
    $region2: #{euar_test.1} parent=1 // pred_check
      _
    $region3: #{euar_test.1} parent=1 // pred_check_branch
      %16 = sbr.rel (0) target = $region5
    $region4: #{euar_test.1} parent=1 // pred_region
      _
    $region5: #{euar_test.1} parent=1 // pred_fallthru
      _
    // Predicated region
    $region6: #{euar_test.1} parent=1 // pred_check
      _
    $region7: #{euar_test.1} parent=1 // pred_check_branch
      %18 = sbr.rel (0) target = $region9
    $region8: #{euar_test.1} parent=1 // pred_region
      %s20 = ssub.s32 14336, 14336
      %21 = vsyncadd [#allocation3], %s20
      %s22 = sshll.u32 [#allocation2], 4
      %s23 = int_to_ptr.vmem [resolvable:$true] %s22
      %28 = dma.hbm_to_vmem [thread:$0]  %s1, 14336, %s23, [#allocation3], 64, 64, 4
    $region9: #{euar_test.1} parent=1 // pred_fallthru
      _
    // Predicated region
    $region10: #{euar_test.1} parent=1 // pred_check
      _
    $region11: #{euar_test.1} parent=1 // pred_check_branch
      %30 = sbr.rel (0) target = $region13
    $region12: #{euar_test.1} parent=1 // pred_region
      %s32 = ssub.s32 2048, 2048
      %33 = vsyncadd [#allocation5], %s32
      %s34 = sshll.u32 [#allocation4], 4
      %s35 = int_to_ptr.vmem [resolvable:$true] %s34
      %40 = dma.hbm_to_vmem [thread:$0]  %s2, 2048, %s35, [#allocation5], 128, 128, 8
    $region13: #{euar_test.1} parent=1 // pred_fallthru
      _
    // Predicated region
    $region14: #{euar_test.1} parent=1 // pred_check
      _
    $region15: #{euar_test.1} parent=1 // pred_check_branch
      %42 = sbr.rel (0) target = $region17
    $region16: #{euar_test.1} parent=1 // pred_region
      _
    $region17: #{euar_test.1} parent=1 // pred_fallthru
      _
    // Predicated region
    $region18: #{euar_test.1} parent=1 // pred_check
      _
    $region19: #{euar_test.1} parent=1 // pred_check_branch
      %44 = sbr.rel (0) target = $region21
    $region20: #{euar_test.1} parent=1 // pred_region
      %s46 = ssub.s32 4096, 4096
      %47 = vsyncadd [#allocation5], %s46
      %s48 = sshll.u32 [#allocation6], 4
      %s49 = int_to_ptr.vmem [resolvable:$true] %s48
      %54 = dma.hbm_to_vmem [thread:$0]  %s4, 4096, %s49, [#allocation5], 128, 128, 8
    $region21: #{euar_test.1} parent=1 // pred_fallthru
      _
    // Predicated region
    $region22: #{euar_test.1} parent=1 // pred_check
      _
    $region23: #{euar_test.1} parent=1 // pred_check_branch
      %56 = sbr.rel (0) target = $region25
    $region24: #{euar_test.1} parent=1 // pred_region
      _
    $region25: #{euar_test.1} parent=1 // pred_fallthru
      _
    // Predicated region
    $region26: #{euar_test.1} parent=1 // pred_check
      _
    $region27: #{euar_test.1} parent=1 // pred_check_branch
      %58 = sbr.rel (0) target = $region29
    $region28: #{euar_test.1} parent=1 // pred_region
      %s60 = ssub.s32 384, 384
      %61 = vsyncadd [#allocation8], %s60
      %s63 = sshll.u32 [#allocation7], 4
      %s64 = int_to_ptr.vmem [resolvable:$true] %s63
      %66 = dma.hbm_to_vmem [thread:$0]  %s6, 384, %s64, [#allocation8]
    $region29: #{euar_test.1} parent=1 // pred_fallthru
      _
    // Predicated region
    $region30: #{euar_test.1} parent=1 // pred_check
      _
    $region31: #{euar_test.1} parent=1 // pred_check_branch
      %68 = sbr.rel (0) target = $region33
    $region32: #{euar_test.1} parent=1 // pred_region
      %69 = dma.done [#allocation3], 14336
    $region33: #{euar_test.1} parent=1 // pred_fallthru
      _
    // Predicated region
    $region34: #{euar_test.1} parent=1 // pred_check
      _
    $region35: #{euar_test.1} parent=1 // pred_check_branch
      %71 = sbr.rel (0) target = $region37
    $region36: #{euar_test.1} parent=1 // pred_region
      %72 = dma.done [#allocation5], 2048
    $region37: #{euar_test.1} parent=1 // pred_fallthru
      _
    // Predicated region
    $region38: #{euar_test.1} parent=1 // pred_check
      _
    $region39: #{euar_test.1} parent=1 // pred_check_branch
      %74 = sbr.rel (0) target = $region41
    $region40: #{euar_test.1} parent=1 // pred_region
      %75 = dma.done [#allocation5], 4096
    $region41: #{euar_test.1} parent=1 // pred_fallthru
      _
    // Predicated region
    $region42: #{euar_test.1} parent=1 // pred_check
      _
    $region43: #{euar_test.1} parent=1 // pred_check_branch
      %77 = sbr.rel (0) target = $region45
    $region44: #{euar_test.1} parent=1 // pred_region
      %78 = dma.done [#allocation8], 384
    $region45: #{euar_test.1} parent=1 // pred_fallthru
      _
    %v80 = vld [vmem:[%s0] sm:$0xff]
    %v81 = vld [vmem:[%s0 + $0x8] sm:$0x3f]
    %v82 = vld [vmem:[#allocation2] sm:$0xf]
    %v83 = vld [vmem:[#allocation2 + $0x4] sm:$0xf]
    %v84 = vld [vmem:[#allocation2 + $0x8] sm:$0xf]
    %v85 = vld [vmem:[#allocation2 + $0xc] sm:$0xf]
    %v86 = vld [vmem:[#allocation2 + $0x10] sm:$0xf]
    %v87 = vld [vmem:[#allocation2 + $0x14] sm:$0xf]
    %v88 = vld [vmem:[#allocation2 + $0x18] sm:$0xf]
    %v89 = vld [vmem:[#allocation2 + $0x1c] sm:$0xf]
    %v90 = vld [vmem:[#allocation2 + $0x20] sm:$0xf]
    %v91 = vld [vmem:[#allocation2 + $0x24] sm:$0xf]
    %v92 = vld [vmem:[#allocation2 + $0x28] sm:$0xf]
    %v93 = vld [vmem:[#allocation2 + $0x2c] sm:$0xf]
    %v94 = vld [vmem:[#allocation2 + $0x30] sm:$0xf]
    %v95 = vld [vmem:[#allocation2 + $0x34] sm:$0xf]
    %v96 = vld [vmem:[#allocation2 + $0x38] sm:$0xf]
    %v97 = vld [vmem:[#allocation2 + $0x3c] sm:$0xf]
    %v98 = vld [vmem:[#allocation2 + $0x40] sm:$0xf]
    %v99 = vld [vmem:[#allocation2 + $0x44] sm:$0xf]
    %v100 = vld [vmem:[#allocation2 + $0x48] sm:$0xf]
    %v101 = vld [vmem:[#allocation2 + $0x4c] sm:$0xf]
    %v102 = vld [vmem:[#allocation2 + $0x50] sm:$0xf]
    %v103 = vld [vmem:[#allocation2 + $0x54] sm:$0xf]
    %v104 = vld [vmem:[#allocation2 + $0x58] sm:$0xf]
    %v105 = vld [vmem:[#allocation2 + $0x5c] sm:$0xf]
    %v106 = vld [vmem:[#allocation2 + $0x60] sm:$0xf]
    %v107 = vld [vmem:[#allocation2 + $0x64] sm:$0xf]
    %v108 = vld [vmem:[#allocation2 + $0x68] sm:$0xf]
    %v109 = vld [vmem:[#allocation2 + $0x6c] sm:$0xf]
    %v110 = vld [vmem:[#allocation2 + $0x70] sm:$0xf]
    %v111 = vld [vmem:[#allocation2 + $0x74] sm:$0xf]
    %v112 = vld [vmem:[#allocation2 + $0x78] sm:$0xf]
    %v113 = vld [vmem:[#allocation2 + $0x7c] sm:$0xf]
    %v114 = vld [vmem:[#allocation2 + $0x80] sm:$0xf]
    %v115 = vld [vmem:[#allocation2 + $0x84] sm:$0xf]
    %v116 = vld [vmem:[#allocation2 + $0x88] sm:$0xf]
    %v117 = vld [vmem:[#allocation2 + $0x8c] sm:$0xf]
    %v118 = vld [vmem:[#allocation2 + $0x90] sm:$0xf]
    %v119 = vld [vmem:[#allocation2 + $0x94] sm:$0xf]
    %v120 = vld [vmem:[#allocation2 + $0x98] sm:$0xf]
    %v121 = vld [vmem:[#allocation2 + $0x9c] sm:$0xf]
    %v122 = vld [vmem:[#allocation2 + $0xa0] sm:$0xf]
    %v123 = vld [vmem:[#allocation2 + $0xa4] sm:$0xf]
    %v124 = vld [vmem:[#allocation2 + $0xa8] sm:$0xf]
    %v125 = vld [vmem:[#allocation2 + $0xac] sm:$0xf]
    %v126 = vld [vmem:[#allocation2 + $0xb0] sm:$0xf]
    %v127 = vld [vmem:[#allocation2 + $0xb4] sm:$0xf]
    %v128 = vld [vmem:[#allocation2 + $0xb8] sm:$0xf]
    %v129 = vld [vmem:[#allocation2 + $0xbc] sm:$0xf]
    %v130 = vld [vmem:[#allocation2 + $0xc0] sm:$0xf]
    %v131 = vld [vmem:[#allocation2 + $0xc4] sm:$0xf]
    %v132 = vld [vmem:[#allocation2 + $0xc8] sm:$0xf]
    %v133 = vld [vmem:[#allocation2 + $0xcc] sm:$0xf]
    %v134 = vld [vmem:[#allocation2 + $0xd0] sm:$0xf]
    %v135 = vld [vmem:[#allocation2 + $0xd4] sm:$0xf]
    %v136 = vld [vmem:[#allocation2 + $0xd8] sm:$0xf]
    %v137 = vld [vmem:[#allocation2 + $0xdc] sm:$0xf]
    %v138 = vld [vmem:[#allocation2 + $0xe0] sm:$0xf]
    %v139 = vld [vmem:[#allocation2 + $0xe4] sm:$0xf]
    %v140 = vld [vmem:[#allocation2 + $0xe8] sm:$0xf]
    %v141 = vld [vmem:[#allocation2 + $0xec] sm:$0xf]
    %v142 = vld [vmem:[#allocation2 + $0xf0] sm:$0xf]
    %v143 = vld [vmem:[#allocation2 + $0xf4] sm:$0xf]
    %v144 = vld [vmem:[#allocation2 + $0xf8] sm:$0xf]
    %v145 = vld [vmem:[#allocation2 + $0xfc] sm:$0xf]
    %v146 = vld [vmem:[#allocation2 + $0x100] sm:$0xf]
    %v147 = vld [vmem:[#allocation2 + $0x104] sm:$0xf]
    %v148 = vld [vmem:[#allocation2 + $0x108] sm:$0xf]
    %v149 = vld [vmem:[#allocation2 + $0x10c] sm:$0xf]
    %v150 = vld [vmem:[#allocation2 + $0x110] sm:$0xf]
    %v151 = vld [vmem:[#allocation2 + $0x114] sm:$0xf]
    %v152 = vld [vmem:[#allocation2 + $0x118] sm:$0xf]
    %v153 = vld [vmem:[#allocation2 + $0x11c] sm:$0xf]
    %v154 = vld [vmem:[#allocation2 + $0x120] sm:$0xf]
    %v155 = vld [vmem:[#allocation2 + $0x124] sm:$0xf]
    %v156 = vld [vmem:[#allocation2 + $0x128] sm:$0xf]
    %v157 = vld [vmem:[#allocation2 + $0x12c] sm:$0xf]
    %v158 = vld [vmem:[#allocation2 + $0x130] sm:$0xf]
    %v159 = vld [vmem:[#allocation2 + $0x134] sm:$0xf]
    %v160 = vld [vmem:[#allocation2 + $0x138] sm:$0xf]
    %v161 = vld [vmem:[#allocation2 + $0x13c] sm:$0xf]
    %v162 = vld [vmem:[#allocation2 + $0x140] sm:$0xf]
    %v163 = vld [vmem:[#allocation2 + $0x144] sm:$0xf]
    %v164 = vld [vmem:[#allocation2 + $0x148] sm:$0xf]
    %v165 = vld [vmem:[#allocation2 + $0x14c] sm:$0xf]
    %v166 = vld [vmem:[#allocation2 + $0x150] sm:$0xf]
    %v167 = vld [vmem:[#allocation2 + $0x154] sm:$0xf]
    %v168 = vld [vmem:[#allocation2 + $0x158] sm:$0xf]
    %v169 = vld [vmem:[#allocation2 + $0x15c] sm:$0xf]
    %v170 = vld [vmem:[#allocation2 + $0x160] sm:$0xf]
    %v171 = vld [vmem:[#allocation2 + $0x164] sm:$0xf]
    %v172 = vld [vmem:[#allocation2 + $0x168] sm:$0xf]
    %v173 = vld [vmem:[#allocation2 + $0x16c] sm:$0xf]
    %v174 = vld [vmem:[#allocation2 + $0x170] sm:$0xf]
    %v175 = vld [vmem:[#allocation2 + $0x174] sm:$0xf]
    %v176 = vld [vmem:[#allocation2 + $0x178] sm:$0xf]
    %v177 = vld [vmem:[#allocation2 + $0x17c] sm:$0xf]
    %v178 = vld [vmem:[#allocation2 + $0x180] sm:$0xf]
    %v179 = vld [vmem:[#allocation2 + $0x184] sm:$0xf]
    %v180 = vld [vmem:[#allocation2 + $0x188] sm:$0xf]
    %v181 = vld [vmem:[#allocation2 + $0x18c] sm:$0xf]
    %v182 = vld [vmem:[#allocation2 + $0x190] sm:$0xf]
    %v183 = vld [vmem:[#allocation2 + $0x194] sm:$0xf]
    %v184 = vld [vmem:[#allocation2 + $0x198] sm:$0xf]
    %v185 = vld [vmem:[#allocation2 + $0x19c] sm:$0xf]
    %v186 = vld [vmem:[#allocation2 + $0x1a0] sm:$0xf]
    %v187 = vld [vmem:[#allocation2 + $0x1a4] sm:$0xf]
    %v188 = vld [vmem:[#allocation2 + $0x1a8] sm:$0xf]
    %v189 = vld [vmem:[#allocation2 + $0x1ac] sm:$0xf]
    %v190 = vld [vmem:[#allocation2 + $0x1b0] sm:$0xf]
    %v191 = vld [vmem:[#allocation2 + $0x1b4] sm:$0xf]
    %v192 = vld [vmem:[#allocation2 + $0x1b8] sm:$0xf]
    %v193 = vld [vmem:[#allocation2 + $0x1bc] sm:$0xf]
    %v194 = vld [vmem:[#allocation2 + $0x1c0] sm:$0xf]
    %v195 = vld [vmem:[#allocation2 + $0x1c4] sm:$0xf]
    %v196 = vld [vmem:[#allocation2 + $0x1c8] sm:$0xf]
    %v197 = vld [vmem:[#allocation2 + $0x1cc] sm:$0xf]
    %v198 = vld [vmem:[#allocation2 + $0x1d0] sm:$0xf]
    %v199 = vld [vmem:[#allocation2 + $0x1d4] sm:$0xf]
    %v200 = vld [vmem:[#allocation2 + $0x1d8] sm:$0xf]
    %v201 = vld [vmem:[#allocation2 + $0x1dc] sm:$0xf]
    %v202 = vld [vmem:[#allocation2 + $0x1e0] sm:$0xf]
    %v203 = vld [vmem:[#allocation2 + $0x1e4] sm:$0xf]
    %v204 = vld [vmem:[#allocation2 + $0x1e8] sm:$0xf]
    %v205 = vld [vmem:[#allocation2 + $0x1ec] sm:$0xf]
    %v206 = vld [vmem:[#allocation2 + $0x1f0] sm:$0xf]
    %v207 = vld [vmem:[#allocation2 + $0x1f4] sm:$0xf]
    %v208 = vld [vmem:[#allocation2 + $0x1f8] sm:$0xf]
    %v209 = vld [vmem:[#allocation2 + $0x1fc] sm:$0xf]
    %v210 = vld [vmem:[#allocation2 + $0x200] sm:$0xf]
    %v211 = vld [vmem:[#allocation2 + $0x204] sm:$0xf]
    %v212 = vld [vmem:[#allocation2 + $0x208] sm:$0xf]
    %v213 = vld [vmem:[#allocation2 + $0x20c] sm:$0xf]
    %v214 = vld [vmem:[#allocation2 + $0x210] sm:$0xf]
    %v215 = vld [vmem:[#allocation2 + $0x214] sm:$0xf]
    %v216 = vld [vmem:[#allocation2 + $0x218] sm:$0xf]
    %v217 = vld [vmem:[#allocation2 + $0x21c] sm:$0xf]
    %v218 = vld [vmem:[#allocation2 + $0x220] sm:$0xf]
    %v219 = vld [vmem:[#allocation2 + $0x224] sm:$0xf]
    %v220 = vld [vmem:[#allocation2 + $0x228] sm:$0xf]
    %v221 = vld [vmem:[#allocation2 + $0x22c] sm:$0xf]
    %v222 = vld [vmem:[#allocation2 + $0x230] sm:$0xf]
    %v223 = vld [vmem:[#allocation2 + $0x234] sm:$0xf]
    %v224 = vld [vmem:[#allocation2 + $0x238] sm:$0xf]
    %v225 = vld [vmem:[#allocation2 + $0x23c] sm:$0xf]
    %v226 = vld [vmem:[#allocation2 + $0x240] sm:$0xf]
    %v227 = vld [vmem:[#allocation2 + $0x244] sm:$0xf]
    %v228 = vld [vmem:[#allocation2 + $0x248] sm:$0xf]
    %v229 = vld [vmem:[#allocation2 + $0x24c] sm:$0xf]
    %v230 = vld [vmem:[#allocation2 + $0x250] sm:$0xf]
    %v231 = vld [vmem:[#allocation2 + $0x254] sm:$0xf]
    %v232 = vld [vmem:[#allocation2 + $0x258] sm:$0xf]
    %v233 = vld [vmem:[#allocation2 + $0x25c] sm:$0xf]
    %v234 = vld [vmem:[#allocation2 + $0x260] sm:$0xf]
    %v235 = vld [vmem:[#allocation2 + $0x264] sm:$0xf]
    %v236 = vld [vmem:[#allocation2 + $0x268] sm:$0xf]
    %v237 = vld [vmem:[#allocation2 + $0x26c] sm:$0xf]
    %v238 = vld [vmem:[#allocation2 + $0x270] sm:$0xf]
    %v239 = vld [vmem:[#allocation2 + $0x274] sm:$0xf]
    %v240 = vld [vmem:[#allocation2 + $0x278] sm:$0xf]
    %v241 = vld [vmem:[#allocation2 + $0x27c] sm:$0xf]
    %v242 = vld [vmem:[#allocation2 + $0x280] sm:$0xf]
    %v243 = vld [vmem:[#allocation2 + $0x284] sm:$0xf]
    %v244 = vld [vmem:[#allocation2 + $0x288] sm:$0xf]
    %v245 = vld [vmem:[#allocation2 + $0x28c] sm:$0xf]
    %v246 = vld [vmem:[#allocation2 + $0x290] sm:$0xf]
    %v247 = vld [vmem:[#allocation2 + $0x294] sm:$0xf]
    %v248 = vld [vmem:[#allocation2 + $0x298] sm:$0xf]
    %v249 = vld [vmem:[#allocation2 + $0x29c] sm:$0xf]
    %v250 = vld [vmem:[#allocation2 + $0x2a0] sm:$0xf]
    %v251 = vld [vmem:[#allocation2 + $0x2a4] sm:$0xf]
    %v252 = vld [vmem:[#allocation2 + $0x2a8] sm:$0xf]
    %v253 = vld [vmem:[#allocation2 + $0x2ac] sm:$0xf]
    %v254 = vld [vmem:[#allocation2 + $0x2b0] sm:$0xf]
    %v255 = vld [vmem:[#allocation2 + $0x2b4] sm:$0xf]
    %v256 = vld [vmem:[#allocation2 + $0x2b8] sm:$0xf]
    %v257 = vld [vmem:[#allocation2 + $0x2bc] sm:$0xf]
    %v258 = vld [vmem:[#allocation2 + $0x2c0] sm:$0xf]
    %v259 = vld [vmem:[#allocation2 + $0x2c4] sm:$0xf]
    %v260 = vld [vmem:[#allocation2 + $0x2c8] sm:$0xf]
    %v261 = vld [vmem:[#allocation2 + $0x2cc] sm:$0xf]
    %v262 = vld [vmem:[#allocation2 + $0x2d0] sm:$0xf]
    %v263 = vld [vmem:[#allocation2 + $0x2d4] sm:$0xf]
    %v264 = vld [vmem:[#allocation2 + $0x2d8] sm:$0xf]
    %v265 = vld [vmem:[#allocation2 + $0x2dc] sm:$0xf]
    %v266 = vld [vmem:[#allocation2 + $0x2e0] sm:$0xf]
    %v267 = vld [vmem:[#allocation2 + $0x2e4] sm:$0xf]
    %v268 = vld [vmem:[#allocation2 + $0x2e8] sm:$0xf]
    %v269 = vld [vmem:[#allocation2 + $0x2ec] sm:$0xf]
    %v270 = vld [vmem:[#allocation2 + $0x2f0] sm:$0xf]
    %v271 = vld [vmem:[#allocation2 + $0x2f4] sm:$0xf]
    %v272 = vld [vmem:[#allocation2 + $0x2f8] sm:$0xf]
    %v273 = vld [vmem:[#allocation2 + $0x2fc] sm:$0xf]
    %v274 = vld [vmem:[#allocation2 + $0x300] sm:$0xf]
    %v275 = vld [vmem:[#allocation2 + $0x304] sm:$0xf]
    %v276 = vld [vmem:[#allocation2 + $0x308] sm:$0xf]
    %v277 = vld [vmem:[#allocation2 + $0x30c] sm:$0xf]
    %v278 = vld [vmem:[#allocation2 + $0x310] sm:$0xf]
    %v279 = vld [vmem:[#allocation2 + $0x314] sm:$0xf]
    %v280 = vld [vmem:[#allocation2 + $0x318] sm:$0xf]
    %v281 = vld [vmem:[#allocation2 + $0x31c] sm:$0xf]
    %v282 = vld [vmem:[#allocation2 + $0x320] sm:$0xf]
    %v283 = vld [vmem:[#allocation2 + $0x324] sm:$0xf]
    %v284 = vld [vmem:[#allocation2 + $0x328] sm:$0xf]
    %v285 = vld [vmem:[#allocation2 + $0x32c] sm:$0xf]
    %v286 = vld [vmem:[#allocation2 + $0x330] sm:$0xf]
    %v287 = vld [vmem:[#allocation2 + $0x334] sm:$0xf]
    %v288 = vld [vmem:[#allocation2 + $0x338] sm:$0xf]
    %v289 = vld [vmem:[#allocation2 + $0x33c] sm:$0xf]
    %v290 = vld [vmem:[#allocation2 + $0x340] sm:$0xf]
    %v291 = vld [vmem:[#allocation2 + $0x344] sm:$0xf]
    %v292 = vld [vmem:[#allocation2 + $0x348] sm:$0xf]
    %v293 = vld [vmem:[#allocation2 + $0x34c] sm:$0xf]
    %v294 = vld [vmem:[#allocation2 + $0x350] sm:$0xf]
    %v295 = vld [vmem:[#allocation2 + $0x354] sm:$0xf]
    %v296 = vld [vmem:[#allocation2 + $0x358] sm:$0xf]
    %v297 = vld [vmem:[#allocation2 + $0x35c] sm:$0xf]
    %v298 = vld [vmem:[#allocation2 + $0x360] sm:$0xf]
    %v299 = vld [vmem:[#allocation2 + $0x364] sm:$0xf]
    %v300 = vld [vmem:[#allocation2 + $0x368] sm:$0xf]
    %v301 = vld [vmem:[#allocation2 + $0x36c] sm:$0xf]
    %v302 = vld [vmem:[#allocation2 + $0x370] sm:$0xf]
    %v303 = vld [vmem:[#allocation2 + $0x374] sm:$0xf]
    %v304 = vld [vmem:[#allocation2 + $0x378] sm:$0xf]
    %v305 = vld [vmem:[#allocation2 + $0x37c] sm:$0xf]
    %v306 = vld [vmem:[#allocation7] sm:$0x1]
    %v307 = vlaneseq
    %v308 = vshrl.u32 %v307, 7
    %v309 = vsub.s32 0, %v308
    %v310 = vrot.slane %v306, %v309
    %v313 = vcombine.high %v80, %v80
    %v315 = vunpack.c.l.s4 1966171168
    %v316 = vunpack.c.0.s8 %v315
    %v317 = vlaneseq
    %v318 = vshrl.u32 %v317, 7
    %v319 = vsub.s32 %v316, %v318
    %v320 = vrot.slane %v80, %v319
    %v322 = vunpack.c.l.s4 1966171168
    %v323 = vunpack.c.0.s8 %v322
    %v324 = vlaneseq
    %v325 = vshrl.u32 %v324, 7
    %v326 = vsub.s32 %v323, %v325
    %v327 = vrot.slane %v313, %v326
    %v328 = vcombine.high %v320, %v320
    %v329 = vcombine.high %v327, %v327
    %v331 = vunpack.c.l.s4 1966171168
    %v332 = vunpack.c.0.s8 %v331
    %v333 = vlaneseq
    %v334 = vshrl.u32 %v333, 7
    %v335 = vsub.s32 %v332, %v334
    %v336 = vrot.slane %v320, %v335
    %v338 = vunpack.c.l.s4 1966171168
    %v339 = vunpack.c.0.s8 %v338
    %v340 = vlaneseq
    %v341 = vshrl.u32 %v340, 7
    %v342 = vsub.s32 %v339, %v341
    %v343 = vrot.slane %v327, %v342
    %v345 = vunpack.c.l.s4 1966171168
    %v346 = vunpack.c.0.s8 %v345
    %v347 = vlaneseq
    %v348 = vshrl.u32 %v347, 7
    %v349 = vsub.s32 %v346, %v348
    %v350 = vrot.slane %v328, %v349
    %v352 = vunpack.c.l.s4 1966171168
    %v353 = vunpack.c.0.s8 %v352
    %v354 = vlaneseq
    %v355 = vshrl.u32 %v354, 7
    %v356 = vsub.s32 %v353, %v355
    %v357 = vrot.slane %v329, %v356
    %v358 = vcombine.high %v336, %v336
    %v359 = vcombine.high %v343, %v343
    %v360 = vcombine.high %v350, %v350
    %v361 = vcombine.high %v357, %v357
    %v362 = vcombine.high %v81, %v81
    %v364 = vunpack.c.l.s4 1966171168
    %v365 = vunpack.c.0.s8 %v364
    %v366 = vlaneseq
    %v367 = vshrl.u32 %v366, 7
    %v368 = vsub.s32 %v365, %v367
    %v369 = vrot.slane %v81, %v368
    %v371 = vunpack.c.l.s4 1966171168
    %v372 = vunpack.c.0.s8 %v371
    %v373 = vlaneseq
    %v374 = vshrl.u32 %v373, 7
    %v375 = vsub.s32 %v372, %v374
    %v376 = vrot.slane %v362, %v375
    %v377 = vcombine.high %v369, %v369
    %v378 = vcombine.high %v376, %v376
    %v380 = vunpack.c.l.s4 1966171168
    %v381 = vunpack.c.0.s8 %v380
    %v382 = vlaneseq
    %v383 = vshrl.u32 %v382, 7
    %v384 = vsub.s32 %v381, %v383
    %v385 = vrot.slane %v369, %v384
    %v387 = vunpack.c.l.s4 1966171168
    %v388 = vunpack.c.0.s8 %v387
    %v389 = vlaneseq
    %v390 = vshrl.u32 %v389, 7
    %v391 = vsub.s32 %v388, %v390
    %v392 = vrot.slane %v376, %v391
    %v394 = vunpack.c.l.s4 1966171168
    %v395 = vunpack.c.0.s8 %v394
    %v396 = vlaneseq
    %v397 = vshrl.u32 %v396, 7
    %v398 = vsub.s32 %v395, %v397
    %v399 = vrot.slane %v377, %v398
    %v401 = vunpack.c.l.s4 1966171168
    %v402 = vunpack.c.0.s8 %v401
    %v403 = vlaneseq
    %v404 = vshrl.u32 %v403, 7
    %v405 = vsub.s32 %v402, %v404
    %v406 = vrot.slane %v378, %v405
    %v407 = vcombine.high %v385, %v385
    %v408 = vcombine.high %v399, %v399
    %v647 = vunpack.c.l.b16 %v82
    %v648 = vunpack.c.l.b16 %v83
    %v649 = vunpack.c.l.b16 %v84
    %v650 = vunpack.c.l.b16 %v85
    %v651 = vunpack.c.l.b16 %v86
    %v652 = vunpack.c.l.b16 %v87
    %v653 = vunpack.c.l.b16 %v88
    %v654 = vunpack.c.l.b16 %v89
    %v655 = vunpack.c.l.b16 %v90
    %v656 = vunpack.c.l.b16 %v91
    %v657 = vunpack.c.l.b16 %v92
    %v658 = vunpack.c.l.b16 %v93
    %v659 = vunpack.c.l.b16 %v94
    %v660 = vunpack.c.l.b16 %v95
    %v661 = vunpack.c.l.b16 %v96
    %v662 = vunpack.c.l.b16 %v97
    %v663 = vunpack.c.l.b16 %v98
    %v664 = vunpack.c.l.b16 %v99
    %v665 = vunpack.c.l.b16 %v100
    %v666 = vunpack.c.l.b16 %v101
    %v667 = vunpack.c.l.b16 %v102
    %v668 = vunpack.c.l.b16 %v103
    %v669 = vunpack.c.l.b16 %v104
    %v670 = vunpack.c.l.b16 %v105
    %v671 = vunpack.c.l.b16 %v106
    %v672 = vunpack.c.l.b16 %v107
    %v673 = vunpack.c.l.b16 %v108
    %v674 = vunpack.c.l.b16 %v109
    %v675 = vunpack.c.l.b16 %v110
    %v676 = vunpack.c.l.b16 %v111
    %v677 = vunpack.c.l.b16 %v112
    %v678 = vunpack.c.l.b16 %v113
    %v679 = vunpack.c.l.b16 %v114
    %v680 = vunpack.c.l.b16 %v115
    %v681 = vunpack.c.l.b16 %v116
    %v682 = vunpack.c.l.b16 %v117
    %v683 = vunpack.c.l.b16 %v118
    %v684 = vunpack.c.l.b16 %v119
    %v685 = vunpack.c.l.b16 %v120
    %v686 = vunpack.c.l.b16 %v121
    %v687 = vunpack.c.l.b16 %v122
    %v688 = vunpack.c.l.b16 %v123
    %v689 = vunpack.c.l.b16 %v124
    %v690 = vunpack.c.l.b16 %v125
    %v691 = vunpack.c.l.b16 %v126
    %v692 = vunpack.c.l.b16 %v127
    %v693 = vunpack.c.l.b16 %v128
    %v694 = vunpack.c.l.b16 %v129
    %v695 = vunpack.c.l.b16 %v130
    %v696 = vunpack.c.l.b16 %v131
    %v697 = vunpack.c.l.b16 %v132
    %v698 = vunpack.c.l.b16 %v133
    %v699 = vunpack.c.l.b16 %v134
    %v700 = vunpack.c.l.b16 %v135
    %v701 = vunpack.c.l.b16 %v136
    %v702 = vunpack.c.l.b16 %v137
    %v703 = vunpack.c.l.b16 %v138
    %v704 = vunpack.c.l.b16 %v139
    %v705 = vunpack.c.l.b16 %v140
    %v706 = vunpack.c.l.b16 %v141
    %v707 = vunpack.c.l.b16 %v142
    %v708 = vunpack.c.l.b16 %v143
    %v709 = vunpack.c.l.b16 %v144
    %v710 = vunpack.c.l.b16 %v145
    %v711 = vunpack.c.l.b16 %v146
    %v712 = vunpack.c.l.b16 %v147
    %v713 = vunpack.c.l.b16 %v148
    %v714 = vunpack.c.l.b16 %v149
    %v715 = vunpack.c.l.b16 %v150
    %v716 = vunpack.c.l.b16 %v151
    %v717 = vunpack.c.l.b16 %v152
    %v718 = vunpack.c.l.b16 %v153
    %v719 = vunpack.c.l.b16 %v154
    %v720 = vunpack.c.l.b16 %v155
    %v721 = vunpack.c.l.b16 %v156
    %v722 = vunpack.c.l.b16 %v157
    %v723 = vunpack.c.l.b16 %v158
    %v724 = vunpack.c.l.b16 %v159
    %v725 = vunpack.c.l.b16 %v160
    %v726 = vunpack.c.l.b16 %v161
    %v727 = vunpack.c.l.b16 %v162
    %v728 = vunpack.c.l.b16 %v163
    %v729 = vunpack.c.l.b16 %v164
    %v730 = vunpack.c.l.b16 %v165
    %v731 = vunpack.c.l.b16 %v166
    %v732 = vunpack.c.l.b16 %v167
    %v733 = vunpack.c.l.b16 %v168
    %v734 = vunpack.c.l.b16 %v169
    %v735 = vunpack.c.l.b16 %v170
    %v736 = vunpack.c.l.b16 %v171
    %v737 = vunpack.c.l.b16 %v172
    %v738 = vunpack.c.l.b16 %v173
    %v739 = vunpack.c.l.b16 %v174
    %v740 = vunpack.c.l.b16 %v175
    %v741 = vunpack.c.l.b16 %v176
    %v742 = vunpack.c.l.b16 %v177
    %v743 = vunpack.c.l.b16 %v178
    %v744 = vunpack.c.l.b16 %v179
    %v745 = vunpack.c.l.b16 %v180
    %v746 = vunpack.c.l.b16 %v181
    %v747 = vunpack.c.l.b16 %v182
    %v748 = vunpack.c.l.b16 %v183
    %v749 = vunpack.c.l.b16 %v184
    %v750 = vunpack.c.l.b16 %v185
    %v751 = vunpack.c.l.b16 %v186
    %v752 = vunpack.c.l.b16 %v187
    %v753 = vunpack.c.l.b16 %v188
    %v754 = vunpack.c.l.b16 %v189
    %v755 = vunpack.c.l.b16 %v190
    %v756 = vunpack.c.l.b16 %v191
    %v757 = vunpack.c.l.b16 %v192
    %v758 = vunpack.c.l.b16 %v193
    %v759 = vunpack.c.l.b16 %v194
    %v760 = vunpack.c.l.b16 %v195
    %v761 = vunpack.c.l.b16 %v196
    %v762 = vunpack.c.l.b16 %v197
    %v763 = vunpack.c.l.b16 %v198
    %v764 = vunpack.c.l.b16 %v199
    %v765 = vunpack.c.l.b16 %v200
    %v766 = vunpack.c.l.b16 %v201
    %v767 = vunpack.c.l.b16 %v202
    %v768 = vunpack.c.l.b16 %v203
    %v769 = vunpack.c.l.b16 %v204
    %v770 = vunpack.c.l.b16 %v205
    %v771 = vunpack.c.l.b16 %v206
    %v772 = vunpack.c.l.b16 %v207
    %v773 = vunpack.c.l.b16 %v208
    %v774 = vunpack.c.l.b16 %v209
    %v775 = vunpack.c.l.b16 %v210
    %v776 = vunpack.c.l.b16 %v211
    %v777 = vunpack.c.l.b16 %v212
    %v778 = vunpack.c.l.b16 %v213
    %v779 = vunpack.c.l.b16 %v214
    %v780 = vunpack.c.l.b16 %v215
    %v781 = vunpack.c.l.b16 %v216
    %v782 = vunpack.c.l.b16 %v217
    %v783 = vunpack.c.l.b16 %v218
    %v784 = vunpack.c.l.b16 %v219
    %v785 = vunpack.c.l.b16 %v220
    %v786 = vunpack.c.l.b16 %v221
    %v787 = vunpack.c.l.b16 %v222
    %v788 = vunpack.c.l.b16 %v223
    %v789 = vunpack.c.l.b16 %v224
    %v790 = vunpack.c.l.b16 %v225
    %v791 = vunpack.c.l.b16 %v226
    %v792 = vunpack.c.l.b16 %v227
    %v793 = vunpack.c.l.b16 %v228
    %v794 = vunpack.c.l.b16 %v229
    %v795 = vunpack.c.l.b16 %v230
    %v796 = vunpack.c.l.b16 %v231
    %v797 = vunpack.c.l.b16 %v232
    %v798 = vunpack.c.l.b16 %v233
    %v799 = vunpack.c.l.b16 %v234
    %v800 = vunpack.c.l.b16 %v235
    %v801 = vunpack.c.l.b16 %v236
    %v802 = vunpack.c.l.b16 %v237
    %v803 = vunpack.c.l.b16 %v238
    %v804 = vunpack.c.l.b16 %v239
    %v805 = vunpack.c.l.b16 %v240
    %v806 = vunpack.c.l.b16 %v241
    %v807 = vunpack.c.l.b16 %v242
    %v808 = vunpack.c.l.b16 %v243
    %v809 = vunpack.c.l.b16 %v244
    %v810 = vunpack.c.l.b16 %v245
    %v811 = vunpack.c.l.b16 %v246
    %v812 = vunpack.c.l.b16 %v247
    %v813 = vunpack.c.l.b16 %v248
    %v814 = vunpack.c.l.b16 %v249
    %v815 = vunpack.c.l.b16 %v250
    %v816 = vunpack.c.l.b16 %v251
    %v817 = vunpack.c.l.b16 %v252
    %v818 = vunpack.c.l.b16 %v253
    %v819 = vunpack.c.l.b16 %v254
    %v820 = vunpack.c.l.b16 %v255
    %v821 = vunpack.c.l.b16 %v256
    %v822 = vunpack.c.l.b16 %v257
    %v823 = vunpack.c.l.b16 %v258
    %v824 = vunpack.c.l.b16 %v259
    %v825 = vunpack.c.l.b16 %v260
    %v826 = vunpack.c.l.b16 %v261
    %v827 = vunpack.c.l.b16 %v262
    %v828 = vunpack.c.l.b16 %v263
    %v829 = vunpack.c.l.b16 %v264
    %v830 = vunpack.c.l.b16 %v265
    %v831 = vunpack.c.l.b16 %v266
    %v832 = vunpack.c.l.b16 %v267
    %v833 = vunpack.c.l.b16 %v268
    %v834 = vunpack.c.l.b16 %v269
    %v835 = vunpack.c.l.b16 %v270
    %v836 = vunpack.c.l.b16 %v271
    %v837 = vunpack.c.l.b16 %v272
    %v838 = vunpack.c.l.b16 %v273
    %v839 = vunpack.c.l.b16 %v274
    %v840 = vunpack.c.l.b16 %v275
    %v841 = vunpack.c.l.b16 %v276
    %v842 = vunpack.c.l.b16 %v277
    %v843 = vunpack.c.l.b16 %v278
    %v844 = vunpack.c.l.b16 %v279
    %v845 = vunpack.c.l.b16 %v280
    %v846 = vunpack.c.l.b16 %v281
    %v847 = vunpack.c.l.b16 %v282
    %v848 = vunpack.c.l.b16 %v283
    %v849 = vunpack.c.l.b16 %v284
    %v850 = vunpack.c.l.b16 %v285
    %v851 = vunpack.c.l.b16 %v286
    %v852 = vunpack.c.l.b16 %v287
    %v853 = vunpack.c.l.b16 %v288
    %v854 = vunpack.c.l.b16 %v289
    %v855 = vunpack.c.l.b16 %v290
    %v856 = vunpack.c.l.b16 %v291
    %v857 = vunpack.c.l.b16 %v292
    %v858 = vunpack.c.l.b16 %v293
    %v859 = vunpack.c.l.b16 %v294
    %v860 = vunpack.c.l.b16 %v295
    %v861 = vunpack.c.l.b16 %v296
    %v862 = vunpack.c.l.b16 %v297
    %v863 = vunpack.c.l.b16 %v298
    %v864 = vunpack.c.l.b16 %v299
    %v865 = vunpack.c.l.b16 %v300
    %v866 = vunpack.c.l.b16 %v301
    %v867 = vunpack.c.l.b16 %v302
    %v868 = vunpack.c.l.b16 %v303
    %v869 = vunpack.c.l.b16 %v304
    %v870 = vunpack.c.l.b16 %v305
    %v871 = vpack.c.b16 %v648, %v647
    %v872 = vpack.c.b16 %v650, %v649
    %v873 = vpack.c.b16 %v652, %v651
    %v874 = vpack.c.b16 %v654, %v653
    %v875 = vpack.c.b16 %v656, %v655
    %v876 = vpack.c.b16 %v658, %v657
    %v877 = vpack.c.b16 %v660, %v659
    %v878 = vpack.c.b16 %v662, %v661
    %v879 = vpack.c.b16 %v664, %v663
    %v880 = vpack.c.b16 %v666, %v665
    %v881 = vpack.c.b16 %v668, %v667
    %v882 = vpack.c.b16 %v670, %v669
    %v883 = vpack.c.b16 %v672, %v671
    %v884 = vpack.c.b16 %v674, %v673
    %v885 = vpack.c.b16 %v676, %v675
    %v886 = vpack.c.b16 %v678, %v677
    %v887 = vpack.c.b16 %v680, %v679
    %v888 = vpack.c.b16 %v682, %v681
    %v889 = vpack.c.b16 %v684, %v683
    %v890 = vpack.c.b16 %v686, %v685
    %v891 = vpack.c.b16 %v688, %v687
    %v892 = vpack.c.b16 %v690, %v689
    %v893 = vpack.c.b16 %v692, %v691
    %v894 = vpack.c.b16 %v694, %v693
    %v895 = vpack.c.b16 %v696, %v695
    %v896 = vpack.c.b16 %v698, %v697
    %v897 = vpack.c.b16 %v700, %v699
    %v898 = vpack.c.b16 %v702, %v701
    %v899 = vpack.c.b16 %v704, %v703
    %v900 = vpack.c.b16 %v706, %v705
    %v901 = vpack.c.b16 %v708, %v707
    %v902 = vpack.c.b16 %v710, %v709
    %v903 = vpack.c.b16 %v712, %v711
    %v904 = vpack.c.b16 %v714, %v713
    %v905 = vpack.c.b16 %v716, %v715
    %v906 = vpack.c.b16 %v718, %v717
    %v907 = vpack.c.b16 %v720, %v719
    %v908 = vpack.c.b16 %v722, %v721
    %v909 = vpack.c.b16 %v724, %v723
    %v910 = vpack.c.b16 %v726, %v725
    %v911 = vpack.c.b16 %v728, %v727
    %v912 = vpack.c.b16 %v730, %v729
    %v913 = vpack.c.b16 %v732, %v731
    %v914 = vpack.c.b16 %v734, %v733
    %v915 = vpack.c.b16 %v736, %v735
    %v916 = vpack.c.b16 %v738, %v737
    %v917 = vpack.c.b16 %v740, %v739
    %v918 = vpack.c.b16 %v742, %v741
    %v919 = vpack.c.b16 %v744, %v743
    %v920 = vpack.c.b16 %v746, %v745
    %v921 = vpack.c.b16 %v748, %v747
    %v922 = vpack.c.b16 %v750, %v749
    %v923 = vpack.c.b16 %v752, %v751
    %v924 = vpack.c.b16 %v754, %v753
    %v925 = vpack.c.b16 %v756, %v755
    %v926 = vpack.c.b16 %v758, %v757
    %v927 = vpack.c.b16 %v760, %v759
    %v928 = vpack.c.b16 %v762, %v761
    %v929 = vpack.c.b16 %v764, %v763
    %v930 = vpack.c.b16 %v766, %v765
    %v931 = vpack.c.b16 %v768, %v767
    %v932 = vpack.c.b16 %v770, %v769
    %v933 = vpack.c.b16 %v772, %v771
    %v934 = vpack.c.b16 %v774, %v773
    %v935 = vpack.c.b16 %v776, %v775
    %v936 = vpack.c.b16 %v778, %v777
    %v937 = vpack.c.b16 %v780, %v779
    %v938 = vpack.c.b16 %v782, %v781
    %v939 = vpack.c.b16 %v784, %v783
    %v940 = vpack.c.b16 %v786, %v785
    %v941 = vpack.c.b16 %v788, %v787
    %v942 = vpack.c.b16 %v790, %v789
    %v943 = vpack.c.b16 %v792, %v791
    %v944 = vpack.c.b16 %v794, %v793
    %v945 = vpack.c.b16 %v796, %v795
    %v946 = vpack.c.b16 %v798, %v797
    %v947 = vpack.c.b16 %v800, %v799
    %v948 = vpack.c.b16 %v802, %v801
    %v949 = vpack.c.b16 %v804, %v803
    %v950 = vpack.c.b16 %v806, %v805
    %v951 = vpack.c.b16 %v808, %v807
    %v952 = vpack.c.b16 %v810, %v809
    %v953 = vpack.c.b16 %v812, %v811
    %v954 = vpack.c.b16 %v814, %v813
    %v955 = vpack.c.b16 %v816, %v815
    %v956 = vpack.c.b16 %v818, %v817
    %v957 = vpack.c.b16 %v820, %v819
    %v958 = vpack.c.b16 %v822, %v821
    %v959 = vpack.c.b16 %v824, %v823
    %v960 = vpack.c.b16 %v826, %v825
    %v961 = vpack.c.b16 %v828, %v827
    %v962 = vpack.c.b16 %v830, %v829
    %v963 = vpack.c.b16 %v832, %v831
    %v964 = vpack.c.b16 %v834, %v833
    %v965 = vpack.c.b16 %v836, %v835
    %v966 = vpack.c.b16 %v838, %v837
    %v967 = vpack.c.b16 %v840, %v839
    %v968 = vpack.c.b16 %v842, %v841
    %v969 = vpack.c.b16 %v844, %v843
    %v970 = vpack.c.b16 %v846, %v845
    %v971 = vpack.c.b16 %v848, %v847
    %v972 = vpack.c.b16 %v850, %v849
    %v973 = vpack.c.b16 %v852, %v851
    %v974 = vpack.c.b16 %v854, %v853
    %v975 = vpack.c.b16 %v856, %v855
    %v976 = vpack.c.b16 %v858, %v857
    %v977 = vpack.c.b16 %v860, %v859
    %v978 = vpack.c.b16 %v862, %v861
    %v979 = vpack.c.b16 %v864, %v863
    %v980 = vpack.c.b16 %v866, %v865
    %v981 = vpack.c.b16 %v868, %v867
    %v982 = vpack.c.b16 %v870, %v869
    %1095 = vmatprep.subr.bf16.mxu0 0
    %1096 = vmatpush1.bf16.msra.mxu0 %v878
    %1097 = vmatprep.subr.bf16.mxu0 0
    %1098 = vmatpush1.bf16.msra.mxu0 %v877
    %1099 = vmatprep.subr.bf16.mxu0 0
    %1100 = vmatpush1.bf16.msra.mxu0 %v876
    %1101 = vmatprep.subr.bf16.mxu0 0
    %1102 = vmatpush1.bf16.msra.mxu0 %v875
    %1103 = vmatprep.subr.bf16.mxu0 0
    %1104 = vmatpush1.bf16.msra.mxu0 %v874
    %1105 = vmatprep.subr.bf16.mxu0 0
    %1106 = vmatpush1.bf16.msra.mxu0 %v873
    %1107 = vmatprep.subr.bf16.mxu0 0
    %1108 = vmatpush1.bf16.msra.mxu0 %v872
    %1109 = vmatprep.subr.bf16.mxu0 0
    %1110 = vmatpush1.bf16.msra.mxu0 %v871
    %1111 = vmatprep.subr.bf16.mxu0 0
    %1112 = vmatpush2.bf16.msra.mxu0 %v886
    %1113 = vmatprep.subr.bf16.mxu0 0
    %1114 = vmatpush2.bf16.msra.mxu0 %v885
    %1115 = vmatprep.subr.bf16.mxu0 0
    %1116 = vmatpush2.bf16.msra.mxu0 %v884
    %1117 = vmatprep.subr.bf16.mxu0 0
    %1118 = vmatpush2.bf16.msra.mxu0 %v883
    %1119 = vmatprep.subr.bf16.mxu0 0
    %1120 = vmatpush2.bf16.msra.mxu0 %v882
    %1121 = vmatprep.subr.bf16.mxu0 0
    %1122 = vmatpush2.bf16.msra.mxu0 %v881
    %1123 = vmatprep.subr.bf16.mxu0 0
    %1124 = vmatpush2.bf16.msra.mxu0 %v880
    %1125 = vmatprep.subr.bf16.mxu0 0
    %1126 = vmatpush2.bf16.msra.mxu0 %v879
    %1127 = vmatprep.mubr.bf16.mxu0 %v350
    %1128 = vmatmul.mubr.bf16.gmra.mxu0 %v336
    %v1129 = vpop.f32.mrf.mxu0
    %v1130 = vadd.f32 %v310, %v1129
    %v1131 = vpop.f32.mrf.mxu0
    %v1132 = vpop.f32.mrf.mxu0
    %v1133 = vpop.f32.mrf.mxu0
    %1134 = vdwg.mxu0
    %1135 = vmatprep.subr.bf16.mxu0 0
    %1136 = vmatpush1.bf16.msra.mxu0 %v894
    %1137 = vmatprep.subr.bf16.mxu0 0
    %1138 = vmatpush1.bf16.msra.mxu0 %v893
    %1139 = vmatprep.subr.bf16.mxu0 0
    %1140 = vmatpush1.bf16.msra.mxu0 %v892
    %1141 = vmatprep.subr.bf16.mxu0 0
    %1142 = vmatpush1.bf16.msra.mxu0 %v891
    %1143 = vmatprep.subr.bf16.mxu0 0
    %1144 = vmatpush1.bf16.msra.mxu0 %v890
    %1145 = vmatprep.subr.bf16.mxu0 0
    %1146 = vmatpush1.bf16.msra.mxu0 %v889
    %1147 = vmatprep.subr.bf16.mxu0 0
    %1148 = vmatpush1.bf16.msra.mxu0 %v888
    %1149 = vmatprep.subr.bf16.mxu0 0
    %1150 = vmatpush1.bf16.msra.mxu0 %v887
    %1151 = vmatprep.subr.bf16.mxu0 0
    %1152 = vmatpush2.bf16.msra.mxu0 %v902
    %1153 = vmatprep.subr.bf16.mxu0 0
    %1154 = vmatpush2.bf16.msra.mxu0 %v901
    %1155 = vmatprep.subr.bf16.mxu0 0
    %1156 = vmatpush2.bf16.msra.mxu0 %v900
    %1157 = vmatprep.subr.bf16.mxu0 0
    %1158 = vmatpush2.bf16.msra.mxu0 %v899
    %1159 = vmatprep.subr.bf16.mxu0 0
    %1160 = vmatpush2.bf16.msra.mxu0 %v898
    %1161 = vmatprep.subr.bf16.mxu0 0
    %1162 = vmatpush2.bf16.msra.mxu0 %v897
    %1163 = vmatprep.subr.bf16.mxu0 0
    %1164 = vmatpush2.bf16.msra.mxu0 %v896
    %1165 = vmatprep.subr.bf16.mxu0 0
    %1166 = vmatpush2.bf16.msra.mxu0 %v895
    %1167 = vmatprep.mubr.bf16.mxu0 %v360
    %1168 = vmatmul.mubr.bf16.gmra.mxu0 %v358
    %v1169 = vpop.f32.mrf.mxu0
    %v1170 = vadd.f32 %v1130, %v1169
    %v1171 = vpop.f32.mrf.mxu0
    %v1172 = vpop.f32.mrf.mxu0
    %v1173 = vpop.f32.mrf.mxu0
    %1174 = vdwg.mxu0
    %1175 = vmatprep.subr.bf16.mxu0 0
    %1176 = vmatpush1.bf16.msra.mxu0 %v910
    %1177 = vmatprep.subr.bf16.mxu0 0
    %1178 = vmatpush1.bf16.msra.mxu0 %v909
    %1179 = vmatprep.subr.bf16.mxu0 0
    %1180 = vmatpush1.bf16.msra.mxu0 %v908
    %1181 = vmatprep.subr.bf16.mxu0 0
    %1182 = vmatpush1.bf16.msra.mxu0 %v907
    %1183 = vmatprep.subr.bf16.mxu0 0
    %1184 = vmatpush1.bf16.msra.mxu0 %v906
    %1185 = vmatprep.subr.bf16.mxu0 0
    %1186 = vmatpush1.bf16.msra.mxu0 %v905
    %1187 = vmatprep.subr.bf16.mxu0 0
    %1188 = vmatpush1.bf16.msra.mxu0 %v904
    %1189 = vmatprep.subr.bf16.mxu0 0
    %1190 = vmatpush1.bf16.msra.mxu0 %v903
    %1191 = vmatprep.subr.bf16.mxu0 0
    %1192 = vmatpush2.bf16.msra.mxu0 %v918
    %1193 = vmatprep.subr.bf16.mxu0 0
    %1194 = vmatpush2.bf16.msra.mxu0 %v917
    %1195 = vmatprep.subr.bf16.mxu0 0
    %1196 = vmatpush2.bf16.msra.mxu0 %v916
    %1197 = vmatprep.subr.bf16.mxu0 0
    %1198 = vmatpush2.bf16.msra.mxu0 %v915
    %1199 = vmatprep.subr.bf16.mxu0 0
    %1200 = vmatpush2.bf16.msra.mxu0 %v914
    %1201 = vmatprep.subr.bf16.mxu0 0
    %1202 = vmatpush2.bf16.msra.mxu0 %v913
    %1203 = vmatprep.subr.bf16.mxu0 0
    %1204 = vmatpush2.bf16.msra.mxu0 %v912
    %1205 = vmatprep.subr.bf16.mxu0 0
    %1206 = vmatpush2.bf16.msra.mxu0 %v911
    %1207 = vmatprep.mubr.bf16.mxu0 %v357
    %1208 = vmatmul.mubr.bf16.gmra.mxu0 %v343
    %v1209 = vpop.f32.mrf.mxu0
    %v1210 = vadd.f32 %v1170, %v1209
    %v1211 = vpop.f32.mrf.mxu0
    %v1212 = vpop.f32.mrf.mxu0
    %v1213 = vpop.f32.mrf.mxu0
    %1214 = vdwg.mxu0
    %1215 = vmatprep.subr.bf16.mxu0 0
    %1216 = vmatpush1.bf16.msra.mxu0 %v926
    %1217 = vmatprep.subr.bf16.mxu0 0
    %1218 = vmatpush1.bf16.msra.mxu0 %v925
    %1219 = vmatprep.subr.bf16.mxu0 0
    %1220 = vmatpush1.bf16.msra.mxu0 %v924
    %1221 = vmatprep.subr.bf16.mxu0 0
    %1222 = vmatpush1.bf16.msra.mxu0 %v923
    %1223 = vmatprep.subr.bf16.mxu0 0
    %1224 = vmatpush1.bf16.msra.mxu0 %v922
    %1225 = vmatprep.subr.bf16.mxu0 0
    %1226 = vmatpush1.bf16.msra.mxu0 %v921
    %1227 = vmatprep.subr.bf16.mxu0 0
    %1228 = vmatpush1.bf16.msra.mxu0 %v920
    %1229 = vmatprep.subr.bf16.mxu0 0
    %1230 = vmatpush1.bf16.msra.mxu0 %v919
    %1231 = vmatprep.subr.bf16.mxu0 0
    %1232 = vmatpush2.bf16.msra.mxu0 %v934
    %1233 = vmatprep.subr.bf16.mxu0 0
    %1234 = vmatpush2.bf16.msra.mxu0 %v933
    %1235 = vmatprep.subr.bf16.mxu0 0
    %1236 = vmatpush2.bf16.msra.mxu0 %v932
    %1237 = vmatprep.subr.bf16.mxu0 0
    %1238 = vmatpush2.bf16.msra.mxu0 %v931
    %1239 = vmatprep.subr.bf16.mxu0 0
    %1240 = vmatpush2.bf16.msra.mxu0 %v930
    %1241 = vmatprep.subr.bf16.mxu0 0
    %1242 = vmatpush2.bf16.msra.mxu0 %v929
    %1243 = vmatprep.subr.bf16.mxu0 0
    %1244 = vmatpush2.bf16.msra.mxu0 %v928
    %1245 = vmatprep.subr.bf16.mxu0 0
    %1246 = vmatpush2.bf16.msra.mxu0 %v927
    %1247 = vmatprep.mubr.bf16.mxu0 %v361
    %1248 = vmatmul.mubr.bf16.gmra.mxu0 %v359
    %v1249 = vpop.f32.mrf.mxu0
    %v1250 = vadd.f32 %v1210, %v1249
    %v1251 = vpop.f32.mrf.mxu0
    %v1252 = vpop.f32.mrf.mxu0
    %v1253 = vpop.f32.mrf.mxu0
    %1254 = vdwg.mxu0
    %1255 = vmatprep.subr.bf16.mxu0 0
    %1256 = vmatpush1.bf16.msra.mxu0 %v942
    %1257 = vmatprep.subr.bf16.mxu0 0
    %1258 = vmatpush1.bf16.msra.mxu0 %v941
    %1259 = vmatprep.subr.bf16.mxu0 0
    %1260 = vmatpush1.bf16.msra.mxu0 %v940
    %1261 = vmatprep.subr.bf16.mxu0 0
    %1262 = vmatpush1.bf16.msra.mxu0 %v939
    %1263 = vmatprep.subr.bf16.mxu0 0
    %1264 = vmatpush1.bf16.msra.mxu0 %v938
    %1265 = vmatprep.subr.bf16.mxu0 0
    %1266 = vmatpush1.bf16.msra.mxu0 %v937
    %1267 = vmatprep.subr.bf16.mxu0 0
    %1268 = vmatpush1.bf16.msra.mxu0 %v936
    %1269 = vmatprep.subr.bf16.mxu0 0
    %1270 = vmatpush1.bf16.msra.mxu0 %v935
    %1271 = vmatprep.subr.bf16.mxu0 0
    %1272 = vmatpush2.bf16.msra.mxu0 %v950
    %1273 = vmatprep.subr.bf16.mxu0 0
    %1274 = vmatpush2.bf16.msra.mxu0 %v949
    %1275 = vmatprep.subr.bf16.mxu0 0
    %1276 = vmatpush2.bf16.msra.mxu0 %v948
    %1277 = vmatprep.subr.bf16.mxu0 0
    %1278 = vmatpush2.bf16.msra.mxu0 %v947
    %1279 = vmatprep.subr.bf16.mxu0 0
    %1280 = vmatpush2.bf16.msra.mxu0 %v946
    %1281 = vmatprep.subr.bf16.mxu0 0
    %1282 = vmatpush2.bf16.msra.mxu0 %v945
    %1283 = vmatprep.subr.bf16.mxu0 0
    %1284 = vmatpush2.bf16.msra.mxu0 %v944
    %1285 = vmatprep.subr.bf16.mxu0 0
    %1286 = vmatpush2.bf16.msra.mxu0 %v943
    %1287 = vmatprep.mubr.bf16.mxu0 %v399
    %1288 = vmatmul.mubr.bf16.gmra.mxu0 %v385
    %v1289 = vpop.f32.mrf.mxu0
    %v1290 = vadd.f32 %v1250, %v1289
    %v1291 = vpop.f32.mrf.mxu0
    %v1292 = vpop.f32.mrf.mxu0
    %v1293 = vpop.f32.mrf.mxu0
    %1294 = vdwg.mxu0
    %1295 = vmatprep.subr.bf16.mxu0 0
    %1296 = vmatpush1.bf16.msra.mxu0 %v958
    %1297 = vmatprep.subr.bf16.mxu0 0
    %1298 = vmatpush1.bf16.msra.mxu0 %v957
    %1299 = vmatprep.subr.bf16.mxu0 0
    %1300 = vmatpush1.bf16.msra.mxu0 %v956
    %1301 = vmatprep.subr.bf16.mxu0 0
    %1302 = vmatpush1.bf16.msra.mxu0 %v955
    %1303 = vmatprep.subr.bf16.mxu0 0
    %1304 = vmatpush1.bf16.msra.mxu0 %v954
    %1305 = vmatprep.subr.bf16.mxu0 0
    %1306 = vmatpush1.bf16.msra.mxu0 %v953
    %1307 = vmatprep.subr.bf16.mxu0 0
    %1308 = vmatpush1.bf16.msra.mxu0 %v952
    %1309 = vmatprep.subr.bf16.mxu0 0
    %1310 = vmatpush1.bf16.msra.mxu0 %v951
    %1311 = vmatprep.subr.bf16.mxu0 0
    %1312 = vmatpush2.bf16.msra.mxu0 %v966
    %1313 = vmatprep.subr.bf16.mxu0 0
    %1314 = vmatpush2.bf16.msra.mxu0 %v965
    %1315 = vmatprep.subr.bf16.mxu0 0
    %1316 = vmatpush2.bf16.msra.mxu0 %v964
    %1317 = vmatprep.subr.bf16.mxu0 0
    %1318 = vmatpush2.bf16.msra.mxu0 %v963
    %1319 = vmatprep.subr.bf16.mxu0 0
    %1320 = vmatpush2.bf16.msra.mxu0 %v962
    %1321 = vmatprep.subr.bf16.mxu0 0
    %1322 = vmatpush2.bf16.msra.mxu0 %v961
    %1323 = vmatprep.subr.bf16.mxu0 0
    %1324 = vmatpush2.bf16.msra.mxu0 %v960
    %1325 = vmatprep.subr.bf16.mxu0 0
    %1326 = vmatpush2.bf16.msra.mxu0 %v959
    %1327 = vmatprep.mubr.bf16.mxu0 %v408
    %1328 = vmatmul.mubr.bf16.gmra.mxu0 %v407
    %v1329 = vpop.f32.mrf.mxu0
    %v1330 = vadd.f32 %v1290, %v1329
    %v1331 = vpop.f32.mrf.mxu0
    %v1332 = vpop.f32.mrf.mxu0
    %v1333 = vpop.f32.mrf.mxu0
    %1334 = vdwg.mxu0
    %1335 = vmatprep.subr.bf16.mxu0 0
    %1336 = vmatpush1.bf16.msra.mxu0 %v974
    %1337 = vmatprep.subr.bf16.mxu0 0
    %1338 = vmatpush1.bf16.msra.mxu0 %v973
    %1339 = vmatprep.subr.bf16.mxu0 0
    %1340 = vmatpush1.bf16.msra.mxu0 %v972
    %1341 = vmatprep.subr.bf16.mxu0 0
    %1342 = vmatpush1.bf16.msra.mxu0 %v971
    %1343 = vmatprep.subr.bf16.mxu0 0
    %1344 = vmatpush1.bf16.msra.mxu0 %v970
    %1345 = vmatprep.subr.bf16.mxu0 0
    %1346 = vmatpush1.bf16.msra.mxu0 %v969
    %1347 = vmatprep.subr.bf16.mxu0 0
    %1348 = vmatpush1.bf16.msra.mxu0 %v968
    %1349 = vmatprep.subr.bf16.mxu0 0
    %1350 = vmatpush1.bf16.msra.mxu0 %v967
    %1351 = vmatprep.subr.bf16.mxu0 0
    %1352 = vmatpush2.bf16.msra.mxu0 %v982
    %1353 = vmatprep.subr.bf16.mxu0 0
    %1354 = vmatpush2.bf16.msra.mxu0 %v981
    %1355 = vmatprep.subr.bf16.mxu0 0
    %1356 = vmatpush2.bf16.msra.mxu0 %v980
    %1357 = vmatprep.subr.bf16.mxu0 0
    %1358 = vmatpush2.bf16.msra.mxu0 %v979
    %1359 = vmatprep.subr.bf16.mxu0 0
    %1360 = vmatpush2.bf16.msra.mxu0 %v978
    %1361 = vmatprep.subr.bf16.mxu0 0
    %1362 = vmatpush2.bf16.msra.mxu0 %v977
    %1363 = vmatprep.subr.bf16.mxu0 0
    %1364 = vmatpush2.bf16.msra.mxu0 %v976
    %1365 = vmatprep.subr.bf16.mxu0 0
    %1366 = vmatpush2.bf16.msra.mxu0 %v975
    %1367 = vmatprep.mubr.bf16.mxu0 %v406
    %1368 = vmatmul.mubr.bf16.gmra.mxu0 %v392
    %v1369 = vpop.f32.mrf.mxu0
    %v1370 = vadd.f32 %v1330, %v1369
    %v1371 = vpop.f32.mrf.mxu0
    %v1372 = vpop.f32.mrf.mxu0
    %v1373 = vpop.f32.mrf.mxu0
    %1374 = vdwg.mxu0
    %vm1375 = vcmask 1041408
    %v1376 = vsel %vm1375, %v1370, 0.0
    %1377 = vadd.xlane.f32.xlu0 %v1376
    %v1378 = vpop.xlane.xlu0 %1377
    %v1379 = vmul.f32 %v1378, 0.013888889
    %v1380 = vmul.f32 %v1370, %v1370
    %v1381 = vsel %vm1375, %v1380, 0.0
    %1382 = vadd.xlane.f32.xlu0 %v1381
    %v1383 = vpop.xlane.xlu0 %1382
    %v1384 = vmul.f32 %v1383, 0.013888889
    %v1385 = vmul.f32 %v1379, %v1379
    %v1386 = vsub.f32 %v1384, %v1385
    %v1387 = vmax.f32 %v1386, 0.0
    %v1388 = vld [vmem:[#allocation7 + $0x1] sm:$0x1]
    %v1389 = vld [vmem:[#allocation7 + $0x2] sm:$0x1]
    %v1390 = vsub.f32 %v1370, %v1379
    %v1391 = vadd.f32 %v1387, 2e-05
    %v1392 = vrsqrt.pop %v1391
    %v1393 = vmul.f32 %v1390, %v1392
    %v1394 = vlaneseq
    %v1395 = vshrl.u32 %v1394, 7
    %v1396 = vsub.s32 0, %v1395
    %v1397 = vrot.slane %v1388, %v1396
    %v1398 = vmul.f32 %v1393, %v1397
    %v1399 = vlaneseq
    %v1400 = vshrl.u32 %v1399, 7
    %v1401 = vsub.s32 0, %v1400
    %v1402 = vrot.slane %v1389, %v1401
    %v1403 = vadd.f32 %v1398, %v1402
    %v1404 = vmax.f32 %v1403, 0.0
    %v1405 = vld [vmem:[#allocation4] sm:$0xff]
    %v1406 = vld [vmem:[#allocation4 + $0x8] sm:$0xff]
    %v1407 = vld [vmem:[#allocation4 + $0x10] sm:$0xff]
    %v1408 = vld [vmem:[#allocation4 + $0x18] sm:$0xff]
    %v1409 = vld [vmem:[#allocation4 + $0x20] sm:$0xff]
    %v1410 = vld [vmem:[#allocation4 + $0x28] sm:$0xff]
    %v1411 = vld [vmem:[#allocation4 + $0x30] sm:$0xff]
    %v1412 = vld [vmem:[#allocation4 + $0x38] sm:$0xff]
    %v1413 = vld [vmem:[#allocation4 + $0x40] sm:$0xff]
    %v1414 = vld [vmem:[#allocation4 + $0x48] sm:$0xff]
    %v1415 = vld [vmem:[#allocation4 + $0x50] sm:$0xff]
    %v1416 = vld [vmem:[#allocation4 + $0x58] sm:$0xff]
    %v1417 = vld [vmem:[#allocation4 + $0x60] sm:$0xff]
    %v1418 = vld [vmem:[#allocation4 + $0x68] sm:$0xff]
    %v1419 = vld [vmem:[#allocation4 + $0x70] sm:$0xff]
    %v1420 = vld [vmem:[#allocation4 + $0x78] sm:$0xff]
    %v1421 = vld [vmem:[#allocation7 + $0x4] sm:$0x1]
    %v1422 = vlaneseq
    %v1423 = vshrl.u32 %v1422, 7
    %v1424 = vsub.s32 0, %v1423
    %v1425 = vrot.slane %v1421, %v1424
    %1426 = vmatprep.subr.mxu0 0.0
    %1427 = vmatpush1.msra.mxu0 %v1420
    %1428 = vmatprep.subr.mxu0 0.0
    %1429 = vmatpush1.msra.mxu0 %v1419
    %1430 = vmatprep.subr.mxu0 0.0
    %1431 = vmatpush1.msra.mxu0 %v1418
    %1432 = vmatprep.subr.mxu0 0.0
    %1433 = vmatpush1.msra.mxu0 %v1417
    %1434 = vmatprep.subr.mxu0 0.0
    %1435 = vmatpush1.msra.mxu0 %v1416
    %1436 = vmatprep.subr.mxu0 0.0
    %1437 = vmatpush1.msra.mxu0 %v1415
    %1438 = vmatprep.subr.mxu0 0.0
    %1439 = vmatpush1.msra.mxu0 %v1414
    %1440 = vmatprep.subr.mxu0 0.0
    %1441 = vmatpush1.msra.mxu0 %v1413
    %1442 = vmatprep.subr.mxu0 0.0
    %1443 = vmatpush1.msra.mxu0 %v1412
    %1444 = vmatprep.subr.mxu0 0.0
    %1445 = vmatpush1.msra.mxu0 %v1411
    %1446 = vmatprep.subr.mxu0 0.0
    %1447 = vmatpush1.msra.mxu0 %v1410
    %1448 = vmatprep.subr.mxu0 0.0
    %1449 = vmatpush1.msra.mxu0 %v1409
    %1450 = vmatprep.subr.mxu0 0.0
    %1451 = vmatpush1.msra.mxu0 %v1408
    %1452 = vmatprep.subr.mxu0 0.0
    %1453 = vmatpush1.msra.mxu0 %v1407
    %1454 = vmatprep.subr.mxu0 0.0
    %1455 = vmatpush1.msra.mxu0 %v1406
    %1456 = vmatprep.subr.mxu0 0.0
    %1457 = vmatpush1.msra.mxu0 %v1405
    %1458 = vmatprep.subr.mxu0 0.0
    %1459 = vmatpush2.msra.mxu0 0.0
    %1460 = vmatprep.subr.mxu0 0.0
    %1461 = vmatpush2.msra.mxu0 0.0
    %1462 = vmatprep.subr.mxu0 0.0
    %1463 = vmatpush2.msra.mxu0 0.0
    %1464 = vmatprep.subr.mxu0 0.0
    %1465 = vmatpush2.msra.mxu0 0.0
    %1466 = vmatprep.subr.mxu0 0.0
    %1467 = vmatpush2.msra.mxu0 0.0
    %1468 = vmatprep.subr.mxu0 0.0
    %1469 = vmatpush2.msra.mxu0 0.0
    %1470 = vmatprep.subr.mxu0 0.0
    %1471 = vmatpush2.msra.mxu0 0.0
    %1472 = vmatprep.subr.mxu0 0.0
    %1473 = vmatpush2.msra.mxu0 0.0
    %1474 = vmatprep.subr.mxu0 0.0
    %1475 = vmatpush2.msra.mxu0 0.0
    %1476 = vmatprep.subr.mxu0 0.0
    %1477 = vmatpush2.msra.mxu0 0.0
    %1478 = vmatprep.subr.mxu0 0.0
    %1479 = vmatpush2.msra.mxu0 0.0
    %1480 = vmatprep.subr.mxu0 0.0
    %1481 = vmatpush2.msra.mxu0 0.0
    %1482 = vmatprep.subr.mxu0 0.0
    %1483 = vmatpush2.msra.mxu0 0.0
    %1484 = vmatprep.subr.mxu0 0.0
    %1485 = vmatpush2.msra.mxu0 0.0
    %1486 = vmatprep.subr.mxu0 0.0
    %1487 = vmatpush2.msra.mxu0 0.0
    %1488 = vmatprep.subr.mxu0 0.0
    %1489 = vmatpush2.msra.mxu0 0.0
    %1490 = vmatprep.mubr.f32.mxu0 0.0
    %1491 = vmatmul.mubr.f32.gmra.mxu0 %v1404
    %v1492 = vpop.f32.mrf.mxu0
    %v1493 = vadd.f32 %v1425, %v1492
    %v1494 = vpop.f32.mrf.mxu0
    %1495 = vdwg.mxu0
    %v1496 = vsel %vm1375, %v1493, 0.0
    %1497 = vadd.xlane.f32.xlu0 %v1496
    %v1498 = vpop.xlane.xlu0 %1497
    %v1499 = vmul.f32 %v1498, 0.0078125
    %v1500 = vmul.f32 %v1493, %v1493
    %v1501 = vsel %vm1375, %v1500, 0.0
    %1502 = vadd.xlane.f32.xlu0 %v1501
    %v1503 = vpop.xlane.xlu0 %1502
    %v1504 = vmul.f32 %v1503, 0.0078125
    %v1505 = vmul.f32 %v1499, %v1499
    %v1506 = vsub.f32 %v1504, %v1505
    %v1507 = vmax.f32 %v1506, 0.0
    %v1508 = vld [vmem:[#allocation7 + $0x5] sm:$0x1]
    %v1509 = vld [vmem:[#allocation7 + $0x6] sm:$0x1]
    %v1510 = vsub.f32 %v1493, %v1499
    %v1511 = vadd.f32 %v1507, 2e-05
    %v1512 = vrsqrt.pop %v1511
    %v1513 = vmul.f32 %v1510, %v1512
    %v1514 = vlaneseq
    %v1515 = vshrl.u32 %v1514, 7
    %v1516 = vsub.s32 0, %v1515
    %v1517 = vrot.slane %v1508, %v1516
    %v1518 = vmul.f32 %v1513, %v1517
    %v1519 = vlaneseq
    %v1520 = vshrl.u32 %v1519, 7
    %v1521 = vsub.s32 0, %v1520
    %v1522 = vrot.slane %v1509, %v1521
    %v1523 = vadd.f32 %v1518, %v1522
    %v1524 = vmax.f32 %v1523, 0.0
    %v1525 = vld [vmem:[%s3] sm:$0xff]
    %v1526 = vld [vmem:[%s3 + $0x8] sm:$0xff]
    %v1527 = vld [vmem:[%s3 + $0x10] sm:$0xff]
    %v1528 = vld [vmem:[%s3 + $0x18] sm:$0xff]
    %v1529 = vld [vmem:[%s3 + $0x20] sm:$0xff]
    %v1530 = vld [vmem:[%s3 + $0x28] sm:$0xff]
    %v1531 = vld [vmem:[%s3 + $0x30] sm:$0xff]
    %v1532 = vld [vmem:[%s3 + $0x38] sm:$0xff]
    %v1533 = vld [vmem:[%s3 + $0x40] sm:$0xff]
    %v1534 = vld [vmem:[%s3 + $0x48] sm:$0xff]
    %v1535 = vld [vmem:[%s3 + $0x50] sm:$0xff]
    %v1536 = vld [vmem:[%s3 + $0x58] sm:$0xff]
    %v1537 = vld [vmem:[%s3 + $0x60] sm:$0xff]
    %v1538 = vld [vmem:[%s3 + $0x68] sm:$0xff]
    %v1539 = vld [vmem:[%s3 + $0x70] sm:$0xff]
    %v1540 = vld [vmem:[%s3 + $0x78] sm:$0xff]
    %v1541 = vld [vmem:[%s3 + $0x80] sm:$0xff]
    %v1542 = vld [vmem:[%s3 + $0x88] sm:$0xff]
    %v1543 = vld [vmem:[%s3 + $0x90] sm:$0xff]
    %v1544 = vld [vmem:[%s3 + $0x98] sm:$0xff]
    %v1545 = vld [vmem:[%s3 + $0xa0] sm:$0xff]
    %v1546 = vld [vmem:[%s3 + $0xa8] sm:$0xff]
    %v1547 = vld [vmem:[%s3 + $0xb0] sm:$0xff]
    %v1548 = vld [vmem:[%s3 + $0xb8] sm:$0xff]
    %v1549 = vld [vmem:[%s3 + $0xc0] sm:$0xff]
    %v1550 = vld [vmem:[%s3 + $0xc8] sm:$0xff]
    %v1551 = vld [vmem:[%s3 + $0xd0] sm:$0xff]
    %v1552 = vld [vmem:[%s3 + $0xd8] sm:$0xff]
    %v1553 = vld [vmem:[%s3 + $0xe0] sm:$0xff]
    %v1554 = vld [vmem:[%s3 + $0xe8] sm:$0xff]
    %v1555 = vld [vmem:[%s3 + $0xf0] sm:$0xff]
    %v1556 = vld [vmem:[%s3 + $0xf8] sm:$0xff]
    %s1557 = scalar_lea.vmem [#allocation7], 8
    %v1558 = vld [vmem:[%s1557] ss:$4 sm:$0x3]
    %v1560 = vlaneseq
    %v1561 = vshrl.u32 %v1560, 7
    %v1562 = vsub.s32 0, %v1561
    %v1563 = vrot.slane %v1558, %v1562
    %v1564 = vlaneseq
    %v1565 = vshrl.u32 %v1564, 7
    %v1566 = vsub.s32 1, %v1565
    %v1567 = vrot.slane %v1558, %v1566
    %1570 = vmatprep.subr.mxu0 %v1556
    %1571 = vmatpush1.msra.mxu0 %v1555
    %1572 = vmatprep.subr.mxu0 %v1554
    %1573 = vmatpush1.msra.mxu0 %v1553
    %1574 = vmatprep.subr.mxu0 %v1552
    %1575 = vmatpush1.msra.mxu0 %v1551
    %1576 = vmatprep.subr.mxu0 %v1550
    %1577 = vmatpush1.msra.mxu0 %v1549
    %1578 = vmatprep.subr.mxu0 %v1548
    %1579 = vmatpush1.msra.mxu0 %v1547
    %1580 = vmatprep.subr.mxu0 %v1546
    %1581 = vmatpush1.msra.mxu0 %v1545
    %1582 = vmatprep.subr.mxu0 %v1544
    %1583 = vmatpush1.msra.mxu0 %v1543
    %1584 = vmatprep.subr.mxu0 %v1542
    %1585 = vmatpush1.msra.mxu0 %v1541
    %1586 = vmatprep.subr.mxu0 %v1540
    %1587 = vmatpush1.msra.mxu0 %v1539
    %1588 = vmatprep.subr.mxu0 %v1538
    %1589 = vmatpush1.msra.mxu0 %v1537
    %1590 = vmatprep.subr.mxu0 %v1536
    %1591 = vmatpush1.msra.mxu0 %v1535
    %1592 = vmatprep.subr.mxu0 %v1534
    %1593 = vmatpush1.msra.mxu0 %v1533
    %1594 = vmatprep.subr.mxu0 %v1532
    %1595 = vmatpush1.msra.mxu0 %v1531
    %1596 = vmatprep.subr.mxu0 %v1530
    %1597 = vmatpush1.msra.mxu0 %v1529
    %1598 = vmatprep.subr.mxu0 %v1528
    %1599 = vmatpush1.msra.mxu0 %v1527
    %1600 = vmatprep.subr.mxu0 %v1526
    %1601 = vmatpush1.msra.mxu0 %v1525
    %1602 = vmatprep.subr.mxu0 0.0
    %1603 = vmatpush2.msra.mxu0 0.0
    %1604 = vmatprep.subr.mxu0 0.0
    %1605 = vmatpush2.msra.mxu0 0.0
    %1606 = vmatprep.subr.mxu0 0.0
    %1607 = vmatpush2.msra.mxu0 0.0
    %1608 = vmatprep.subr.mxu0 0.0
    %1609 = vmatpush2.msra.mxu0 0.0
    %1610 = vmatprep.subr.mxu0 0.0
    %1611 = vmatpush2.msra.mxu0 0.0
    %1612 = vmatprep.subr.mxu0 0.0
    %1613 = vmatpush2.msra.mxu0 0.0
    %1614 = vmatprep.subr.mxu0 0.0
    %1615 = vmatpush2.msra.mxu0 0.0
    %1616 = vmatprep.subr.mxu0 0.0
    %1617 = vmatpush2.msra.mxu0 0.0
    %1618 = vmatprep.subr.mxu0 0.0
    %1619 = vmatpush2.msra.mxu0 0.0
    %1620 = vmatprep.subr.mxu0 0.0
    %1621 = vmatpush2.msra.mxu0 0.0
    %1622 = vmatprep.subr.mxu0 0.0
    %1623 = vmatpush2.msra.mxu0 0.0
    %1624 = vmatprep.subr.mxu0 0.0
    %1625 = vmatpush2.msra.mxu0 0.0
    %1626 = vmatprep.subr.mxu0 0.0
    %1627 = vmatpush2.msra.mxu0 0.0
    %1628 = vmatprep.subr.mxu0 0.0
    %1629 = vmatpush2.msra.mxu0 0.0
    %1630 = vmatprep.subr.mxu0 0.0
    %1631 = vmatpush2.msra.mxu0 0.0
    %1632 = vmatprep.subr.mxu0 0.0
    %1633 = vmatpush2.msra.mxu0 0.0
    %1634 = vmatprep.mubr.f32.mxu0 0.0
    %1635 = vmatmul.mubr.f32.gmra.mxu0 %v1524
    %v1636 = vpop.f32.mrf.mxu0
    %v1637 = vadd.f32 %v1563, %v1636
    %v1638 = vpop.f32.mrf.mxu0
    %v1639 = vadd.f32 %v1567, %v1638
    %1640 = vdwg.mxu0
    %v1641 = vsel %vm1375, %v1637, 0.0
    %v1642 = vsel %vm1375, %v1639, 0.0
    %v1643 = vadd.f32 %v1641, %v1642
    %1644 = vadd.xlane.f32.xlu0 %v1643
    %v1645 = vpop.xlane.xlu0 %1644
    %v1646 = vmul.f32 %v1645, 0.00390625
    %v1647 = vmul.f32 %v1637, %v1637
    %v1648 = vmul.f32 %v1639, %v1639
    %v1649 = vsel %vm1375, %v1647, 0.0
    %v1650 = vsel %vm1375, %v1648, 0.0
    %v1651 = vadd.f32 %v1649, %v1650
    %1652 = vadd.xlane.f32.xlu0 %v1651
    %v1653 = vpop.xlane.xlu0 %1652
    %v1654 = vmul.f32 %v1653, 0.00390625
    %v1655 = vmul.f32 %v1646, %v1646
    %v1656 = vsub.f32 %v1654, %v1655
    %v1657 = vmax.f32 %v1656, 0.0
    %s1658 = scalar_lea.vmem [#allocation7], 9
    %v1659 = vld [vmem:[%s1658] ss:$4 sm:$0x3]
    %s1660 = scalar_lea.vmem [#allocation7], 10
    %v1661 = vld [vmem:[%s1660] ss:$4 sm:$0x3]
    %v1662 = vsub.f32 %v1637, %v1646
    %v1663 = vsub.f32 %v1639, %v1646
    %v1664 = vadd.f32 %v1657, 1e-05
    %v1665 = vrsqrt.pop %v1664
    %v1666 = vmul.f32 %v1662, %v1665
    %v1667 = vmul.f32 %v1663, %v1665
    %v1669 = vlaneseq
    %v1670 = vshrl.u32 %v1669, 7
    %v1671 = vsub.s32 0, %v1670
    %v1672 = vrot.slane %v1659, %v1671
    %v1673 = vlaneseq
    %v1674 = vshrl.u32 %v1673, 7
    %v1675 = vsub.s32 1, %v1674
    %v1676 = vrot.slane %v1659, %v1675
    %v1679 = vmul.f32 %v1666, %v1672
    %v1680 = vmul.f32 %v1667, %v1676
    %v1682 = vlaneseq
    %v1683 = vshrl.u32 %v1682, 7
    %v1684 = vsub.s32 0, %v1683
    %v1685 = vrot.slane %v1661, %v1684
    %v1686 = vlaneseq
    %v1687 = vshrl.u32 %v1686, 7
    %v1688 = vsub.s32 1, %v1687
    %v1689 = vrot.slane %v1661, %v1688
    %v1692 = vadd.f32 %v1679, %v1685
    %v1693 = vadd.f32 %v1680, %v1689
    %v1694 = vmax.f32 %v1692, 0.0
    %v1695 = vmax.f32 %v1693, 0.0
    %v1696 = vld [vmem:[#allocation6] sm:$0xff]
    %v1697 = vld [vmem:[#allocation6 + $0x8] sm:$0xff]
    %v1698 = vld [vmem:[#allocation6 + $0x10] sm:$0xff]
    %v1699 = vld [vmem:[#allocation6 + $0x18] sm:$0xff]
    %v1700 = vld [vmem:[#allocation6 + $0x20] sm:$0xff]
    %v1701 = vld [vmem:[#allocation6 + $0x28] sm:$0xff]
    %v1702 = vld [vmem:[#allocation6 + $0x30] sm:$0xff]
    %v1703 = vld [vmem:[#allocation6 + $0x38] sm:$0xff]
    %v1704 = vld [vmem:[#allocation6 + $0x40] sm:$0xff]
    %v1705 = vld [vmem:[#allocation6 + $0x48] sm:$0xff]
    %v1706 = vld [vmem:[#allocation6 + $0x50] sm:$0xff]
    %v1707 = vld [vmem:[#allocation6 + $0x58] sm:$0xff]
    %v1708 = vld [vmem:[#allocation6 + $0x60] sm:$0xff]
    %v1709 = vld [vmem:[#allocation6 + $0x68] sm:$0xff]
    %v1710 = vld [vmem:[#allocation6 + $0x70] sm:$0xff]
    %v1711 = vld [vmem:[#allocation6 + $0x78] sm:$0xff]
    %v1712 = vld [vmem:[#allocation6 + $0x80] sm:$0xff]
    %v1713 = vld [vmem:[#allocation6 + $0x88] sm:$0xff]
    %v1714 = vld [vmem:[#allocation6 + $0x90] sm:$0xff]
    %v1715 = vld [vmem:[#allocation6 + $0x98] sm:$0xff]
    %v1716 = vld [vmem:[#allocation6 + $0xa0] sm:$0xff]
    %v1717 = vld [vmem:[#allocation6 + $0xa8] sm:$0xff]
    %v1718 = vld [vmem:[#allocation6 + $0xb0] sm:$0xff]
    %v1719 = vld [vmem:[#allocation6 + $0xb8] sm:$0xff]
    %v1720 = vld [vmem:[#allocation6 + $0xc0] sm:$0xff]
    %v1721 = vld [vmem:[#allocation6 + $0xc8] sm:$0xff]
    %v1722 = vld [vmem:[#allocation6 + $0xd0] sm:$0xff]
    %v1723 = vld [vmem:[#allocation6 + $0xd8] sm:$0xff]
    %v1724 = vld [vmem:[#allocation6 + $0xe0] sm:$0xff]
    %v1725 = vld [vmem:[#allocation6 + $0xe8] sm:$0xff]
    %v1726 = vld [vmem:[#allocation6 + $0xf0] sm:$0xff]
    %v1727 = vld [vmem:[#allocation6 + $0xf8] sm:$0xff]
    %v1728 = vld [vmem:[#allocation7 + $0x10] sm:$0x1]
    %v1729 = vlaneseq
    %v1730 = vshrl.u32 %v1729, 7
    %v1731 = vsub.s32 0, %v1730
    %v1732 = vrot.slane %v1728, %v1731
    %1733 = vmatprep.subr.mxu0 0.0
    %1734 = vmatpush1.msra.mxu0 %v1711
    %1735 = vmatprep.subr.mxu0 0.0
    %1736 = vmatpush1.msra.mxu0 %v1710
    %1737 = vmatprep.subr.mxu0 0.0
    %1738 = vmatpush1.msra.mxu0 %v1709
    %1739 = vmatprep.subr.mxu0 0.0
    %1740 = vmatpush1.msra.mxu0 %v1708
    %1741 = vmatprep.subr.mxu0 0.0
    %1742 = vmatpush1.msra.mxu0 %v1707
    %1743 = vmatprep.subr.mxu0 0.0
    %1744 = vmatpush1.msra.mxu0 %v1706
    %1745 = vmatprep.subr.mxu0 0.0
    %1746 = vmatpush1.msra.mxu0 %v1705
    %1747 = vmatprep.subr.mxu0 0.0
    %1748 = vmatpush1.msra.mxu0 %v1704
    %1749 = vmatprep.subr.mxu0 0.0
    %1750 = vmatpush1.msra.mxu0 %v1703
    %1751 = vmatprep.subr.mxu0 0.0
    %1752 = vmatpush1.msra.mxu0 %v1702
    %1753 = vmatprep.subr.mxu0 0.0
    %1754 = vmatpush1.msra.mxu0 %v1701
    %1755 = vmatprep.subr.mxu0 0.0
    %1756 = vmatpush1.msra.mxu0 %v1700
    %1757 = vmatprep.subr.mxu0 0.0
    %1758 = vmatpush1.msra.mxu0 %v1699
    %1759 = vmatprep.subr.mxu0 0.0
    %1760 = vmatpush1.msra.mxu0 %v1698
    %1761 = vmatprep.subr.mxu0 0.0
    %1762 = vmatpush1.msra.mxu0 %v1697
    %1763 = vmatprep.subr.mxu0 0.0
    %1764 = vmatpush1.msra.mxu0 %v1696
    %1765 = vmatprep.subr.mxu0 0.0
    %1766 = vmatpush2.msra.mxu0 %v1727
    %1767 = vmatprep.subr.mxu0 0.0
    %1768 = vmatpush2.msra.mxu0 %v1726
    %1769 = vmatprep.subr.mxu0 0.0
    %1770 = vmatpush2.msra.mxu0 %v1725
    %1771 = vmatprep.subr.mxu0 0.0
    %1772 = vmatpush2.msra.mxu0 %v1724
    %1773 = vmatprep.subr.mxu0 0.0
    %1774 = vmatpush2.msra.mxu0 %v1723
    %1775 = vmatprep.subr.mxu0 0.0
    %1776 = vmatpush2.msra.mxu0 %v1722
    %1777 = vmatprep.subr.mxu0 0.0
    %1778 = vmatpush2.msra.mxu0 %v1721
    %1779 = vmatprep.subr.mxu0 0.0
    %1780 = vmatpush2.msra.mxu0 %v1720
    %1781 = vmatprep.subr.mxu0 0.0
    %1782 = vmatpush2.msra.mxu0 %v1719
    %1783 = vmatprep.subr.mxu0 0.0
    %1784 = vmatpush2.msra.mxu0 %v1718
    %1785 = vmatprep.subr.mxu0 0.0
    %1786 = vmatpush2.msra.mxu0 %v1717
    %1787 = vmatprep.subr.mxu0 0.0
    %1788 = vmatpush2.msra.mxu0 %v1716
    %1789 = vmatprep.subr.mxu0 0.0
    %1790 = vmatpush2.msra.mxu0 %v1715
    %1791 = vmatprep.subr.mxu0 0.0
    %1792 = vmatpush2.msra.mxu0 %v1714
    %1793 = vmatprep.subr.mxu0 0.0
    %1794 = vmatpush2.msra.mxu0 %v1713
    %1795 = vmatprep.subr.mxu0 0.0
    %1796 = vmatpush2.msra.mxu0 %v1712
    %1797 = vmatprep.mubr.f32.mxu0 %v1695
    %1798 = vmatmul.mubr.f32.gmra.mxu0 %v1694
    %v1799 = vpop.f32.mrf.mxu0
    %v1800 = vadd.f32 %v1732, %v1799
    %v1801 = vpop.f32.mrf.mxu0
    %1802 = vdwg.mxu0
    %v1803 = vsel %vm1375, %v1800, 0.0
    %1804 = vadd.xlane.f32.xlu0 %v1803
    %v1805 = vpop.xlane.xlu0 %1804
    %v1806 = vmul.f32 %v1805, 0.0078125
    %v1807 = vmul.f32 %v1800, %v1800
    %v1808 = vsel %vm1375, %v1807, 0.0
    %1809 = vadd.xlane.f32.xlu0 %v1808
    %v1810 = vpop.xlane.xlu0 %1809
    %v1811 = vmul.f32 %v1810, 0.0078125
    %v1812 = vmul.f32 %v1806, %v1806
    %v1813 = vsub.f32 %v1811, %v1812
    %v1814 = vmax.f32 %v1813, 0.0
    %v1815 = vld [vmem:[#allocation7 + $0x11] sm:$0x1]
    %v1816 = vld [vmem:[#allocation7 + $0x12] sm:$0x1]
    %v1817 = vsub.f32 %v1800, %v1806
    %v1818 = vadd.f32 %v1814, 2e-05
    %v1819 = vrsqrt.pop %v1818
    %v1820 = vmul.f32 %v1817, %v1819
    %v1821 = vlaneseq
    %v1822 = vshrl.u32 %v1821, 7
    %v1823 = vsub.s32 0, %v1822
    %v1824 = vrot.slane %v1815, %v1823
    %v1825 = vmul.f32 %v1820, %v1824
    %v1826 = vlaneseq
    %v1827 = vshrl.u32 %v1826, 7
    %v1828 = vsub.s32 0, %v1827
    %v1829 = vrot.slane %v1816, %v1828
    %v1830 = vadd.f32 %v1825, %v1829
    %v1831 = vmax.f32 %v1830, 0.0
    %v1832 = vld [vmem:[%s5] sm:$0xff]
    %v1833 = vld [vmem:[%s5 + $0x8] sm:$0xff]
    %v1834 = vld [vmem:[%s5 + $0x10] sm:$0xff]
    %v1835 = vld [vmem:[%s5 + $0x18] sm:$0xff]
    %v1836 = vld [vmem:[%s5 + $0x20] sm:$0xff]
    %v1837 = vld [vmem:[%s5 + $0x28] sm:$0xff]
    %v1838 = vld [vmem:[%s5 + $0x30] sm:$0xff]
    %v1839 = vld [vmem:[%s5 + $0x38] sm:$0xff]
    %v1840 = vld [vmem:[%s5 + $0x40] sm:$0xff]
    %v1841 = vld [vmem:[%s5 + $0x48] sm:$0xff]
    %v1842 = vld [vmem:[%s5 + $0x50] sm:$0xff]
    %v1843 = vld [vmem:[%s5 + $0x58] sm:$0xff]
    %v1844 = vld [vmem:[%s5 + $0x60] sm:$0xff]
    %v1845 = vld [vmem:[%s5 + $0x68] sm:$0xff]
    %v1846 = vld [vmem:[%s5 + $0x70] sm:$0xff]
    %v1847 = vld [vmem:[%s5 + $0x78] sm:$0xff]
    %v1848 = vld [vmem:[#allocation7 + $0x14] sm:$0x1]
    %v1849 = vlaneseq
    %v1850 = vshrl.u32 %v1849, 7
    %v1851 = vsub.s32 0, %v1850
    %v1852 = vrot.slane %v1848, %v1851
    %1853 = vmatprep.subr.mxu0 0.0
    %1854 = vmatpush1.msra.mxu0 %v1847
    %1855 = vmatprep.subr.mxu0 0.0
    %1856 = vmatpush1.msra.mxu0 %v1846
    %1857 = vmatprep.subr.mxu0 0.0
    %1858 = vmatpush1.msra.mxu0 %v1845
    %1859 = vmatprep.subr.mxu0 0.0
    %1860 = vmatpush1.msra.mxu0 %v1844
    %1861 = vmatprep.subr.mxu0 0.0
    %1862 = vmatpush1.msra.mxu0 %v1843
    %1863 = vmatprep.subr.mxu0 0.0
    %1864 = vmatpush1.msra.mxu0 %v1842
    %1865 = vmatprep.subr.mxu0 0.0
    %1866 = vmatpush1.msra.mxu0 %v1841
    %1867 = vmatprep.subr.mxu0 0.0
    %1868 = vmatpush1.msra.mxu0 %v1840
    %1869 = vmatprep.subr.mxu0 0.0
    %1870 = vmatpush1.msra.mxu0 %v1839
    %1871 = vmatprep.subr.mxu0 0.0
    %1872 = vmatpush1.msra.mxu0 %v1838
    %1873 = vmatprep.subr.mxu0 0.0
    %1874 = vmatpush1.msra.mxu0 %v1837
    %1875 = vmatprep.subr.mxu0 0.0
    %1876 = vmatpush1.msra.mxu0 %v1836
    %1877 = vmatprep.subr.mxu0 0.0
    %1878 = vmatpush1.msra.mxu0 %v1835
    %1879 = vmatprep.subr.mxu0 0.0
    %1880 = vmatpush1.msra.mxu0 %v1834
    %1881 = vmatprep.subr.mxu0 0.0
    %1882 = vmatpush1.msra.mxu0 %v1833
    %1883 = vmatprep.subr.mxu0 0.0
    %1884 = vmatpush1.msra.mxu0 %v1832
    %1885 = vmatprep.subr.mxu0 0.0
    %1886 = vmatpush2.msra.mxu0 0.0
    %1887 = vmatprep.subr.mxu0 0.0
    %1888 = vmatpush2.msra.mxu0 0.0
    %1889 = vmatprep.subr.mxu0 0.0
    %1890 = vmatpush2.msra.mxu0 0.0
    %1891 = vmatprep.subr.mxu0 0.0
    %1892 = vmatpush2.msra.mxu0 0.0
    %1893 = vmatprep.subr.mxu0 0.0
    %1894 = vmatpush2.msra.mxu0 0.0
    %1895 = vmatprep.subr.mxu0 0.0
    %1896 = vmatpush2.msra.mxu0 0.0
    %1897 = vmatprep.subr.mxu0 0.0
    %1898 = vmatpush2.msra.mxu0 0.0
    %1899 = vmatprep.subr.mxu0 0.0
    %1900 = vmatpush2.msra.mxu0 0.0
    %1901 = vmatprep.subr.mxu0 0.0
    %1902 = vmatpush2.msra.mxu0 0.0
    %1903 = vmatprep.subr.mxu0 0.0
    %1904 = vmatpush2.msra.mxu0 0.0
    %1905 = vmatprep.subr.mxu0 0.0
    %1906 = vmatpush2.msra.mxu0 0.0
    %1907 = vmatprep.subr.mxu0 0.0
    %1908 = vmatpush2.msra.mxu0 0.0
    %1909 = vmatprep.subr.mxu0 0.0
    %1910 = vmatpush2.msra.mxu0 0.0
    %1911 = vmatprep.subr.mxu0 0.0
    %1912 = vmatpush2.msra.mxu0 0.0
    %1913 = vmatprep.subr.mxu0 0.0
    %1914 = vmatpush2.msra.mxu0 0.0
    %1915 = vmatprep.subr.mxu0 0.0
    %1916 = vmatpush2.msra.mxu0 0.0
    %1917 = vmatprep.mubr.f32.mxu0 0.0
    %1918 = vmatmul.mubr.f32.gmra.mxu0 %v1831
    %v1919 = vpop.f32.mrf.mxu0
    %v1920 = vadd.f32 %v1852, %v1919
    %v1921 = vpop.f32.mrf.mxu0
    %1922 = vdwg.mxu0
    %vm1923 = vcmask 1024
    %1924 = vst.msk [vmem:[%s7] sm:$0x3] %vm1923, %v1920
    // Predicated region
    $region46: #{euar_test.1} parent=1 // pred_check
      _
    $region47: #{euar_test.1} parent=1 // pred_check_branch
      %1926 = sbr.rel (0) target = $region49
    $region48: #{euar_test.1} parent=1 // pred_region
      _
    $region49: #{euar_test.1} parent=1 // pred_fallthru
      _
    // Predicated region
    $region50: #{euar_test.1} parent=1 // pred_check
      _
    $region51: #{euar_test.1} parent=1 // pred_check_branch
      %1928 = sbr.rel (0) target = $region53
    $region52: #{euar_test.1} parent=1 // pred_region
      _
    $region53: #{euar_test.1} parent=1 // pred_fallthru
      _
    %1929 = vsyncpa [#allocation3], 1
    %1930 = vsyncpa [#allocation5], 1
    %1931 = vsyncpa [#allocation8], 1

</llo_original>
